<compile_context>
chip_gen: v7x
topology: tpu7x:2x2x1
jax: 0.10.0
libtpu: 0.0.40
codegen_flags: <defaults>
</compile_context>

<pallas_src>
import jax
import jax.numpy as jnp
from jax.experimental import pallas as pl
from jax.experimental.pallas import tpu as pltpu

# ----------------------------- model dims (small) ---------------------------
B, S, H = 2, 8, 32          # batch, seq, hidden_size (config.hidden_size)
NH = 4                      # attention heads
DH = H // NH                # head dim
FF = 64                     # feed-forward size
L = 5                       # num_labels (config.num_lables)
V = 128                     # synthetic vocab size (lane-aligned on purpose)
LN_EPS = 1e-12
LANE = 128                  # lane-padded widths
BS = B * S
assert NH * DH == H

# deliberate deviation flag: approximate EUP reciprocal in softmax denominator
APPROX_SOFTMAX_RECIP = True

# packed bias / LayerNorm vector rows (vec_ref layout)
(R_BQ, R_BK, R_BV, R_BO, R_LN1G, R_LN1B,
 R_B1, R_B2, R_LN2G, R_LN2B, R_BLIN) = range(11)
NVEC = 11


# ---------------- fused embedding + encoder + classifier kernel -------------
def fused_forward_kernel(ids_ref, tok_ref, pos_ref, wqkv_ref, wo_ref,
                         w1_ref, w2_ref, wlin_ref, vec_ref, out_ref):
    """Single-step fused kernel (no grid, everything VMEM-resident).

    ids_ref  : (B*S, 1)    int32 token ids
    tok_ref  : (V, H)      token-embedding table
    pos_ref  : (B*S, H)    positional embedding, pre-tiled over batch
    wqkv_ref : (H, 3*128)  Q|K|V weights, lane-aligned (offsets 0/128/256),
                           1/sqrt(DH) folded into the Q block
    wo_ref   : (H, H)      attention output projection
    w1_ref   : (H, FF)     FFN up-projection
    w2_ref   : (FF, H)     FFN down-projection
    wlin_ref : (H, 128)    classifier weight, lane-padded from (H, L)
    vec_ref  : (11, 128)   all bias / LayerNorm vectors packed row-wise
    out_ref  : (B*S, 128)  lane-padded logits
    """
    vecs = vec_ref[...]
    bq = vecs[R_BQ:R_BQ + 1, :H]
    bk = vecs[R_BK:R_BK + 1, :H]
    bv = vecs[R_BV:R_BV + 1, :H]
    bo = vecs[R_BO:R_BO + 1, :H]
    ln1g = vecs[R_LN1G:R_LN1G + 1, :H]
    ln1b = vecs[R_LN1B:R_LN1B + 1, :H]
    b1 = vecs[R_B1:R_B1 + 1, :FF]
    b2 = vecs[R_B2:R_B2 + 1, :H]
    ln2g = vecs[R_LN2G:R_LN2G + 1, :H]
    ln2b = vecs[R_LN2B:R_LN2B + 1, :H]
    blin = vecs[R_BLIN:R_BLIN + 1, :]                 # (1, 128)

    # ---- embedding: one-hot gather on the (idle) MXU + positional add ------
    ids = ids_ref[...]                                          # (BS, 1) int32
    vocab = jax.lax.broadcasted_iota(jnp.int32, (BS, V), 1)
    onehot = (vocab == ids).astype(jnp.float32)                 # (BS, V)
    x = jnp.dot(onehot, tok_ref[...],
                preferred_element_type=jnp.float32) + pos_ref[...]   # (BS, H)

    # ---- fused, lane-aligned QKV projection (scale folded into Wq/bq) ------
    qkv = jnp.dot(x, wqkv_ref[...], preferred_element_type=jnp.float32)
    q = (qkv[:, 0:H] + bq).reshape(B, S, H)
    k = (qkv[:, LANE:LANE + H] + bk).reshape(B, S, H)
    v = (qkv[:, 2 * LANE:2 * LANE + H] + bv).reshape(B, S, H)

    # ---- multi-head attention, accumulated in vregs (no VMEM scratch) ------
    # TODO(synk): no attention mask — a real HF forward masks padding tokens.
    wo = wo_ref[...]
    attn = bo                                                   # (1, H) -> bcast
    for h in range(NH):                                         # static unroll
        lo = h * DH
        s = jnp.einsum("bqd,bkd->bqk", q[:, :, lo:lo + DH], k[:, :, lo:lo + DH],
                       preferred_element_type=jnp.float32)      # pre-scaled Q
        m = jnp.max(s, axis=-1, keepdims=True)
        e = jnp.exp(s - m)
        denom = jnp.sum(e, axis=-1, keepdims=True)
        if APPROX_SOFTMAX_RECIP:
            p = e * pl.reciprocal(denom, approx=True)           # EUP, ~free slot
        else:
            p = e / denom
        ctxh = jnp.einsum("bqk,bkd->bqd", p, v[:, :, lo:lo + DH],
                          preferred_element_type=jnp.float32)
        # fold this head's Wo row-block directly (no concat, no masked stores)
        attn = attn + jnp.dot(ctxh.reshape(BS, DH), wo[lo:lo + DH, :],
                              preferred_element_type=jnp.float32)

    # ---- residual + LayerNorm 1 ---------------------------------------------
    h1 = x + attn
    mu = jnp.mean(h1, axis=-1, keepdims=True)
    var = jnp.mean((h1 - mu) ** 2, axis=-1, keepdims=True)
    h1 = (h1 - mu) * jax.lax.rsqrt(var + LN_EPS) * ln1g + ln1b

    # ---- feed-forward --------------------------------------------------------
    # TODO(synk): HF BERT uses exact erf GELU; tanh approximation used here
    # (matches the pure-JAX reference below).
    f = jnp.dot(h1, w1_ref[...], preferred_element_type=jnp.float32) + b1
    f = jax.nn.gelu(f)
    f = jnp.dot(f, w2_ref[...], preferred_element_type=jnp.float32) + b2

    # ---- residual + LayerNorm 2 ---------------------------------------------
    h2 = h1 + f
    mu = jnp.mean(h2, axis=-1, keepdims=True)
    var = jnp.mean((h2 - mu) ** 2, axis=-1, keepdims=True)
    h2 = (h2 - mu) * jax.lax.rsqrt(var + LN_EPS) * ln2g + ln2b

    # ---- classifier (linear_map), lane-dense 128-wide store ------------------
    out_ref[...] = (jnp.dot(h2, wlin_ref[...], preferred_element_type=jnp.float32)
                    + blin).astype(out_ref.dtype)


def fused_encoder_classifier(ids_col, packed):
    """One pallas_call, no grid: whole problem (BS=16 rows) is one step.

    At real BERT dims this should become a token-dim grid (256-512 row blocks,
    weights resident via index_map, bf16 weights) with
    dimension_semantics=("parallel",) so v7x uses both TensorCores.
    """
    vmem = pl.BlockSpec(memory_space=pltpu.MemorySpace.VMEM)
    return pl.pallas_call(
        fused_forward_kernel,
        out_shape=jax.ShapeDtypeStruct((BS, LANE), jnp.float32),
        in_specs=[vmem] * 9,
        out_specs=vmem,
    )(ids_col, packed["tok_emb"], packed["pos_flat"], packed["wqkv"],
      packed["wo"], packed["w1"], packed["w2"], packed["wlin"], packed["vecs"])


# ------------------------------ parameter init ------------------------------
def init_params(key):
    ks = jax.random.split(key, 20)
    n = lambda k, shape, s=0.02: (s * jax.random.normal(k, shape)).astype(jnp.float32)
    return {
        "tok_emb": n(ks[0], (V, H)),
        "pos_emb": n(ks[1], (S, H)),
        "wq": n(ks[2], (H, H)), "bq": n(ks[3], (1, H)),
        "wk": n(ks[4], (H, H)), "bk": n(ks[5], (1, H)),
        "wv": n(ks[6], (H, H)), "bv": n(ks[7], (1, H)),
        "wo": n(ks[8], (H, H)), "bo": n(ks[9], (1, H)),
        "ln1g": 1.0 + n(ks[10], (1, H)), "ln1b": n(ks[11], (1, H)),
        "w1": n(ks[12], (H, FF)), "b1": n(ks[13], (1, FF)),
        "w2": n(ks[14], (FF, H)), "b2": n(ks[15], (1, H)),
        "ln2g": 1.0 + n(ks[16], (1, H)), "ln2b": n(ks[17], (1, H)),
        "w_lin": n(ks[18], (H, L)), "b_lin": n(ks[19], (1, L)),
    }


def _row128(v):
    return jnp.zeros((1, LANE), jnp.float32).at[:, :v.shape[1]].set(v)


def pack_params(p):
    """Precompute ALL kernel operand packing ONCE (hoisted off the hot path)."""
    scale = 1.0 / (DH ** 0.5)
    wqkv = jnp.zeros((H, 3 * LANE), jnp.float32)
    wqkv = (wqkv.at[:, 0:H].set(p["wq"] * scale)          # fold 1/sqrt(DH) into Q
                 .at[:, LANE:LANE + H].set(p["wk"])
                 .at[:, 2 * LANE:2 * LANE + H].set(p["wv"]))
    wlin = jnp.zeros((H, LANE), jnp.float32).at[:, :L].set(p["w_lin"])
    vecs = jnp.concatenate([
        _row128(p["bq"] * scale), _row128(p["bk"]), _row128(p["bv"]),
        _row128(p["bo"]), _row128(p["ln1g"]), _row128(p["ln1b"]),
        _row128(p["b1"]), _row128(p["b2"]), _row128(p["ln2g"]),
        _row128(p["ln2b"]), _row128(p["b_lin"]),
    ], axis=0)                                            # (11, 128)
    assert vecs.shape == (NVEC, LANE)
    return {
        "tok_emb": p["tok_emb"],
        "pos_flat": jnp.tile(p["pos_emb"], (B, 1)),       # (BS, H)
        "wqkv": wqkv, "wo": p["wo"], "w1": p["w1"], "w2": p["w2"],
        "wlin": wlin, "vecs": vecs,
    }


# --------------------------- full forward (wrapper) --------------------------
@jax.jit
def transformer_model_forward(token_ids, packed):
    # "pretrained_model(x)[0]" stand-in + linear_map, all inside ONE kernel.
    # TODO(synk): the real HF pretrained model (BERT/RoBERTa/XLNet) cannot be
    # reproduced without its checkpoint; a single synthetic encoder layer with
    # identical shape/axis semantics (output[0] = (B, S, H)) is used.
    ids_col = token_ids.reshape(BS, 1).astype(jnp.int32)
    out = fused_encoder_classifier(ids_col, packed)       # (BS, 128) lane-dense
    return out.reshape(B, S, LANE)[:, :, :L]              # (B, S, num_labels)


# ------------------------------ pure-JAX reference ---------------------------
def reference_forward(token_ids, p):
    x = jnp.take(p["tok_emb"], token_ids, axis=0) + p["pos_emb"][None]
    q = x @ p["wq"] + p["bq"]
    k = x @ p["wk"] + p["bk"]
    v = x @ p["wv"] + p["bv"]
    qh = q.reshape(B, S, NH, DH).transpose(0, 2, 1, 3)
    kh = k.reshape(B, S, NH, DH).transpose(0, 2, 1, 3)
    vh = v.reshape(B, S, NH, DH).transpose(0, 2, 1, 3)
    scores = jnp.einsum("bhqd,bhkd->bhqk", qh, kh) / (DH ** 0.5)
    probs = jax.nn.softmax(scores, axis=-1)
    ctx = jnp.einsum("bhqk,bhkd->bhqd", probs, vh).transpose(0, 2, 1, 3).reshape(B, S, H)
    attn = ctx @ p["wo"] + p["bo"]

    def ln(z, g, b):
        mu = z.mean(-1, keepdims=True)
        var = ((z - mu) ** 2).mean(-1, keepdims=True)
        return (z - mu) * jax.lax.rsqrt(var + LN_EPS) * g + b

    h1 = ln(x + attn, p["ln1g"], p["ln1b"])
    f = jax.nn.gelu(h1 @ p["w1"] + p["b1"]) @ p["w2"] + p["b2"]
    h2 = ln(h1 + f, p["ln2g"], p["ln2b"])
    return h2 @ p["w_lin"] + p["b_lin"]


if __name__ == "__main__":
    key = jax.random.PRNGKey(0)
    k_ids, k_params = jax.random.split(key)
    token_ids = jax.random.randint(k_ids, (B, S), 0, V, dtype=jnp.int32)
    params = init_params(k_params)
    packed = pack_params(params)          # one-time packing, outside the jit

    out = transformer_model_forward(token_ids, packed)
    out = jax.block_until_ready(out)
    assert out.shape == (B, S, L), out.shape

    ref = reference_forward(token_ids, params)
    err = float(jnp.max(jnp.abs(out - ref)))
    assert jnp.allclose(out, ref, atol=2e-3, rtol=2e-3), err

    print("KERNEL_OK")
</pallas_src>

<mosaic_0001>
module attributes {stable_mosaic.version = 11 : i64} {
  func.func @fused_forward_kernel(%arg0: memref<16x1xi32, #tpu.memory_space<vmem>>, %arg1: memref<128x32xf32, #tpu.memory_space<vmem>>, %arg2: memref<16x32xf32, #tpu.memory_space<vmem>>, %arg3: memref<32x384xf32, #tpu.memory_space<vmem>>, %arg4: memref<32x32xf32, #tpu.memory_space<vmem>>, %arg5: memref<32x64xf32, #tpu.memory_space<vmem>>, %arg6: memref<64x32xf32, #tpu.memory_space<vmem>>, %arg7: memref<32x128xf32, #tpu.memory_space<vmem>>, %arg8: memref<11x128xf32, #tpu.memory_space<vmem>>, %arg9: memref<16x128xf32, #tpu.memory_space<vmem>>) attributes {dimension_semantics = [], scalar_prefetch = 0 : i64, scratch_operands = 0 : i64, tpu.core_type = #tpu.core_type<tc>} {
    %c0 = arith.constant 0 : index
    %c0_0 = arith.constant 0 : index
    %0 = vector.load %arg8[%c0, %c0_0] : memref<11x128xf32, #tpu.memory_space<vmem>>, vector<11x128xf32>
    %1 = vector.extract_strided_slice %0 {offsets = [0, 0], sizes = [1, 32], strides = [1, 1]} : vector<11x128xf32> to vector<1x32xf32>
    %2 = vector.extract_strided_slice %0 {offsets = [1, 0], sizes = [1, 32], strides = [1, 1]} : vector<11x128xf32> to vector<1x32xf32>
    %3 = vector.extract_strided_slice %0 {offsets = [2, 0], sizes = [1, 32], strides = [1, 1]} : vector<11x128xf32> to vector<1x32xf32>
    %4 = vector.extract_strided_slice %0 {offsets = [3, 0], sizes = [1, 32], strides = [1, 1]} : vector<11x128xf32> to vector<1x32xf32>
    %5 = vector.extract_strided_slice %0 {offsets = [4, 0], sizes = [1, 32], strides = [1, 1]} : vector<11x128xf32> to vector<1x32xf32>
    %6 = vector.extract_strided_slice %0 {offsets = [5, 0], sizes = [1, 32], strides = [1, 1]} : vector<11x128xf32> to vector<1x32xf32>
    %7 = vector.extract_strided_slice %0 {offsets = [6, 0], sizes = [1, 64], strides = [1, 1]} : vector<11x128xf32> to vector<1x64xf32>
    %8 = vector.extract_strided_slice %0 {offsets = [7, 0], sizes = [1, 32], strides = [1, 1]} : vector<11x128xf32> to vector<1x32xf32>
    %9 = vector.extract_strided_slice %0 {offsets = [8, 0], sizes = [1, 32], strides = [1, 1]} : vector<11x128xf32> to vector<1x32xf32>
    %10 = vector.extract_strided_slice %0 {offsets = [9, 0], sizes = [1, 32], strides = [1, 1]} : vector<11x128xf32> to vector<1x32xf32>
    %11 = vector.extract_strided_slice %0 {offsets = [10, 0], sizes = [1, 128], strides = [1, 1]} : vector<11x128xf32> to vector<1x128xf32>
    %c0_1 = arith.constant 0 : index
    %c0_2 = arith.constant 0 : index
    %12 = vector.load %arg0[%c0_1, %c0_2] : memref<16x1xi32, #tpu.memory_space<vmem>>, vector<16x1xi32>
    %13 = tpu.iota {dimensions = array<i32: 1>} : vector<16x128xi32>
    %14 = vector.broadcast %12 : vector<16x1xi32> to vector<16x128xi32>
    %15 = arith.cmpi eq, %13, %14 : vector<16x128xi32>
    %16 = arith.extui %15 : vector<16x128xi1> to vector<16x128xi32>
    %17 = arith.sitofp %16 : vector<16x128xi32> to vector<16x128xf32>
    %c0_3 = arith.constant 0 : index
    %c0_4 = arith.constant 0 : index
    %18 = vector.load %arg1[%c0_3, %c0_4] : memref<128x32xf32, #tpu.memory_space<vmem>>, vector<128x32xf32>
    %cst = arith.constant dense<0.000000e+00> : vector<16x32xf32>
    %19 = tpu.matmul %17, %18, %cst {dimension_numbers = #tpu.dot_dimension_numbers<[1], [0], [0], [1], [0, 0, 1, 1], [], []>} : vector<16x128xf32>, vector<128x32xf32>, vector<16x32xf32> -> vector<16x32xf32>
    %c0_5 = arith.constant 0 : index
    %c0_6 = arith.constant 0 : index
    %20 = vector.load %arg2[%c0_5, %c0_6] : memref<16x32xf32, #tpu.memory_space<vmem>>, vector<16x32xf32>
    %21 = arith.addf %19, %20 : vector<16x32xf32>
    %c0_7 = arith.constant 0 : index
    %c0_8 = arith.constant 0 : index
    %22 = vector.load %arg3[%c0_7, %c0_8] : memref<32x384xf32, #tpu.memory_space<vmem>>, vector<32x384xf32>
    %cst_9 = arith.constant dense<0.000000e+00> : vector<16x384xf32>
    %23 = tpu.matmul %21, %22, %cst_9 {dimension_numbers = #tpu.dot_dimension_numbers<[1], [0], [0], [1], [0, 0, 1, 1], [], []>} : vector<16x32xf32>, vector<32x384xf32>, vector<16x384xf32> -> vector<16x384xf32>
    %24 = vector.extract_strided_slice %23 {offsets = [0, 0], sizes = [16, 32], strides = [1, 1]} : vector<16x384xf32> to vector<16x32xf32>
    %25 = vector.broadcast %1 : vector<1x32xf32> to vector<16x32xf32>
    %26 = arith.addf %24, %25 : vector<16x32xf32>
    %27 = vector.shape_cast %26 : vector<16x32xf32> to vector<2x8x32xf32>
    %28 = vector.extract_strided_slice %23 {offsets = [0, 128], sizes = [16, 32], strides = [1, 1]} : vector<16x384xf32> to vector<16x32xf32>
    %29 = vector.broadcast %2 : vector<1x32xf32> to vector<16x32xf32>
    %30 = arith.addf %28, %29 : vector<16x32xf32>
    %31 = vector.shape_cast %30 : vector<16x32xf32> to vector<2x8x32xf32>
    %32 = vector.extract_strided_slice %23 {offsets = [0, 256], sizes = [16, 32], strides = [1, 1]} : vector<16x384xf32> to vector<16x32xf32>
    %33 = vector.broadcast %3 : vector<1x32xf32> to vector<16x32xf32>
    %34 = arith.addf %32, %33 : vector<16x32xf32>
    %35 = vector.shape_cast %34 : vector<16x32xf32> to vector<2x8x32xf32>
    %c0_10 = arith.constant 0 : index
    %c0_11 = arith.constant 0 : index
    %36 = vector.load %arg4[%c0_10, %c0_11] : memref<32x32xf32, #tpu.memory_space<vmem>>, vector<32x32xf32>
    %37 = vector.extract_strided_slice %27 {offsets = [0, 0, 0], sizes = [2, 8, 8], strides = [1, 1, 1]} : vector<2x8x32xf32> to vector<2x8x8xf32>
    %38 = vector.extract_strided_slice %31 {offsets = [0, 0, 0], sizes = [2, 8, 8], strides = [1, 1, 1]} : vector<2x8x32xf32> to vector<2x8x8xf32>
    "tpu.trace_start"() <{level = 10 : i32, message = "bqd,bkd->bqk"}> : () -> ()
    %cst_12 = arith.constant dense<0.000000e+00> : vector<2x8x8xf32>
    %39 = tpu.matmul %37, %38, %cst_12 {dimension_numbers = #tpu.dot_dimension_numbers<[2], [2], [1], [1], [0, 0, 0, 1, 1, 1], [0], [0]>} : vector<2x8x8xf32>, vector<2x8x8xf32>, vector<2x8x8xf32> -> vector<2x8x8xf32>
    "tpu.trace_stop"() : () -> ()
    %cst_13 = arith.constant dense<0xFF800000> : vector<2x8xf32>
    %40 = vector.multi_reduction <maximumf>, %39, %cst_13 [2] : vector<2x8x8xf32> to vector<2x8xf32>
    %41 = vector.shape_cast %40 : vector<2x8xf32> to vector<2x8x1xf32>
    %42 = vector.broadcast %41 : vector<2x8x1xf32> to vector<2x8x8xf32>
    %43 = arith.subf %39, %42 : vector<2x8x8xf32>
    %44 = math.exp %43 : vector<2x8x8xf32>
    %cst_14 = arith.constant dense<0.000000e+00> : vector<2x8xf32>
    %45 = vector.multi_reduction <add>, %44, %cst_14 [2] : vector<2x8x8xf32> to vector<2x8xf32>
    %46 = vector.shape_cast %45 : vector<2x8xf32> to vector<2x8x1xf32>
    %47 = tpu.reciprocal %46 {approx = true} : vector<2x8x1xf32> -> vector<2x8x1xf32>
    %48 = vector.broadcast %47 : vector<2x8x1xf32> to vector<2x8x8xf32>
    %49 = arith.mulf %44, %48 : vector<2x8x8xf32>
    %50 = vector.extract_strided_slice %35 {offsets = [0, 0, 0], sizes = [2, 8, 8], strides = [1, 1, 1]} : vector<2x8x32xf32> to vector<2x8x8xf32>
    "tpu.trace_start"() <{level = 10 : i32, message = "bqk,bkd->bqd"}> : () -> ()
    %cst_15 = arith.constant dense<0.000000e+00> : vector<2x8x8xf32>
    %51 = tpu.matmul %49, %50, %cst_15 {dimension_numbers = #tpu.dot_dimension_numbers<[2], [1], [1], [2], [0, 0, 0, 1, 1, 2], [0], [0]>} : vector<2x8x8xf32>, vector<2x8x8xf32>, vector<2x8x8xf32> -> vector<2x8x8xf32>
    "tpu.trace_stop"() : () -> ()
    %52 = vector.shape_cast %51 : vector<2x8x8xf32> to vector<16x8xf32>
    %53 = vector.extract_strided_slice %36 {offsets = [0, 0], sizes = [8, 32], strides = [1, 1]} : vector<32x32xf32> to vector<8x32xf32>
    %cst_16 = arith.constant dense<0.000000e+00> : vector<16x32xf32>
    %54 = tpu.matmul %52, %53, %cst_16 {dimension_numbers = #tpu.dot_dimension_numbers<[1], [0], [0], [1], [0, 0, 1, 1], [], []>} : vector<16x8xf32>, vector<8x32xf32>, vector<16x32xf32> -> vector<16x32xf32>
    %55 = vector.broadcast %4 : vector<1x32xf32> to vector<16x32xf32>
    %56 = arith.addf %55, %54 : vector<16x32xf32>
    %57 = vector.extract_strided_slice %27 {offsets = [0, 0, 8], sizes = [2, 8, 8], strides = [1, 1, 1]} : vector<2x8x32xf32> to vector<2x8x8xf32>
    %58 = vector.extract_strided_slice %31 {offsets = [0, 0, 8], sizes = [2, 8, 8], strides = [1, 1, 1]} : vector<2x8x32xf32> to vector<2x8x8xf32>
    "tpu.trace_start"() <{level = 10 : i32, message = "bqd,bkd->bqk"}> : () -> ()
    %cst_17 = arith.constant dense<0.000000e+00> : vector<2x8x8xf32>
    %59 = tpu.matmul %57, %58, %cst_17 {dimension_numbers = #tpu.dot_dimension_numbers<[2], [2], [1], [1], [0, 0, 0, 1, 1, 1], [0], [0]>} : vector<2x8x8xf32>, vector<2x8x8xf32>, vector<2x8x8xf32> -> vector<2x8x8xf32>
    "tpu.trace_stop"() : () -> ()
    %cst_18 = arith.constant dense<0xFF800000> : vector<2x8xf32>
    %60 = vector.multi_reduction <maximumf>, %59, %cst_18 [2] : vector<2x8x8xf32> to vector<2x8xf32>
    %61 = vector.shape_cast %60 : vector<2x8xf32> to vector<2x8x1xf32>
    %62 = vector.broadcast %61 : vector<2x8x1xf32> to vector<2x8x8xf32>
    %63 = arith.subf %59, %62 : vector<2x8x8xf32>
    %64 = math.exp %63 : vector<2x8x8xf32>
    %cst_19 = arith.constant dense<0.000000e+00> : vector<2x8xf32>
    %65 = vector.multi_reduction <add>, %64, %cst_19 [2] : vector<2x8x8xf32> to vector<2x8xf32>
    %66 = vector.shape_cast %65 : vector<2x8xf32> to vector<2x8x1xf32>
    %67 = tpu.reciprocal %66 {approx = true} : vector<2x8x1xf32> -> vector<2x8x1xf32>
    %68 = vector.broadcast %67 : vector<2x8x1xf32> to vector<2x8x8xf32>
    %69 = arith.mulf %64, %68 : vector<2x8x8xf32>
    %70 = vector.extract_strided_slice %35 {offsets = [0, 0, 8], sizes = [2, 8, 8], strides = [1, 1, 1]} : vector<2x8x32xf32> to vector<2x8x8xf32>
    "tpu.trace_start"() <{level = 10 : i32, message = "bqk,bkd->bqd"}> : () -> ()
    %cst_20 = arith.constant dense<0.000000e+00> : vector<2x8x8xf32>
    %71 = tpu.matmul %69, %70, %cst_20 {dimension_numbers = #tpu.dot_dimension_numbers<[2], [1], [1], [2], [0, 0, 0, 1, 1, 2], [0], [0]>} : vector<2x8x8xf32>, vector<2x8x8xf32>, vector<2x8x8xf32> -> vector<2x8x8xf32>
    "tpu.trace_stop"() : () -> ()
    %72 = vector.shape_cast %71 : vector<2x8x8xf32> to vector<16x8xf32>
    %73 = vector.extract_strided_slice %36 {offsets = [8, 0], sizes = [8, 32], strides = [1, 1]} : vector<32x32xf32> to vector<8x32xf32>
    %cst_21 = arith.constant dense<0.000000e+00> : vector<16x32xf32>
    %74 = tpu.matmul %72, %73, %cst_21 {dimension_numbers = #tpu.dot_dimension_numbers<[1], [0], [0], [1], [0, 0, 1, 1], [], []>} : vector<16x8xf32>, vector<8x32xf32>, vector<16x32xf32> -> vector<16x32xf32>
    %75 = arith.addf %56, %74 : vector<16x32xf32>
    %76 = vector.extract_strided_slice %27 {offsets = [0, 0, 16], sizes = [2, 8, 8], strides = [1, 1, 1]} : vector<2x8x32xf32> to vector<2x8x8xf32>
    %77 = vector.extract_strided_slice %31 {offsets = [0, 0, 16], sizes = [2, 8, 8], strides = [1, 1, 1]} : vector<2x8x32xf32> to vector<2x8x8xf32>
    "tpu.trace_start"() <{level = 10 : i32, message = "bqd,bkd->bqk"}> : () -> ()
    %cst_22 = arith.constant dense<0.000000e+00> : vector<2x8x8xf32>
    %78 = tpu.matmul %76, %77, %cst_22 {dimension_numbers = #tpu.dot_dimension_numbers<[2], [2], [1], [1], [0, 0, 0, 1, 1, 1], [0], [0]>} : vector<2x8x8xf32>, vector<2x8x8xf32>, vector<2x8x8xf32> -> vector<2x8x8xf32>
    "tpu.trace_stop"() : () -> ()
    %cst_23 = arith.constant dense<0xFF800000> : vector<2x8xf32>
    %79 = vector.multi_reduction <maximumf>, %78, %cst_23 [2] : vector<2x8x8xf32> to vector<2x8xf32>
    %80 = vector.shape_cast %79 : vector<2x8xf32> to vector<2x8x1xf32>
    %81 = vector.broadcast %80 : vector<2x8x1xf32> to vector<2x8x8xf32>
    %82 = arith.subf %78, %81 : vector<2x8x8xf32>
    %83 = math.exp %82 : vector<2x8x8xf32>
    %cst_24 = arith.constant dense<0.000000e+00> : vector<2x8xf32>
    %84 = vector.multi_reduction <add>, %83, %cst_24 [2] : vector<2x8x8xf32> to vector<2x8xf32>
    %85 = vector.shape_cast %84 : vector<2x8xf32> to vector<2x8x1xf32>
    %86 = tpu.reciprocal %85 {approx = true} : vector<2x8x1xf32> -> vector<2x8x1xf32>
    %87 = vector.broadcast %86 : vector<2x8x1xf32> to vector<2x8x8xf32>
    %88 = arith.mulf %83, %87 : vector<2x8x8xf32>
    %89 = vector.extract_strided_slice %35 {offsets = [0, 0, 16], sizes = [2, 8, 8], strides = [1, 1, 1]} : vector<2x8x32xf32> to vector<2x8x8xf32>
    "tpu.trace_start"() <{level = 10 : i32, message = "bqk,bkd->bqd"}> : () -> ()
    %cst_25 = arith.constant dense<0.000000e+00> : vector<2x8x8xf32>
    %90 = tpu.matmul %88, %89, %cst_25 {dimension_numbers = #tpu.dot_dimension_numbers<[2], [1], [1], [2], [0, 0, 0, 1, 1, 2], [0], [0]>} : vector<2x8x8xf32>, vector<2x8x8xf32>, vector<2x8x8xf32> -> vector<2x8x8xf32>
    "tpu.trace_stop"() : () -> ()
    %91 = vector.shape_cast %90 : vector<2x8x8xf32> to vector<16x8xf32>
    %92 = vector.extract_strided_slice %36 {offsets = [16, 0], sizes = [8, 32], strides = [1, 1]} : vector<32x32xf32> to vector<8x32xf32>
    %cst_26 = arith.constant dense<0.000000e+00> : vector<16x32xf32>
    %93 = tpu.matmul %91, %92, %cst_26 {dimension_numbers = #tpu.dot_dimension_numbers<[1], [0], [0], [1], [0, 0, 1, 1], [], []>} : vector<16x8xf32>, vector<8x32xf32>, vector<16x32xf32> -> vector<16x32xf32>
    %94 = arith.addf %75, %93 : vector<16x32xf32>
    %95 = vector.extract_strided_slice %27 {offsets = [0, 0, 24], sizes = [2, 8, 8], strides = [1, 1, 1]} : vector<2x8x32xf32> to vector<2x8x8xf32>
    %96 = vector.extract_strided_slice %31 {offsets = [0, 0, 24], sizes = [2, 8, 8], strides = [1, 1, 1]} : vector<2x8x32xf32> to vector<2x8x8xf32>
    "tpu.trace_start"() <{level = 10 : i32, message = "bqd,bkd->bqk"}> : () -> ()
    %cst_27 = arith.constant dense<0.000000e+00> : vector<2x8x8xf32>
    %97 = tpu.matmul %95, %96, %cst_27 {dimension_numbers = #tpu.dot_dimension_numbers<[2], [2], [1], [1], [0, 0, 0, 1, 1, 1], [0], [0]>} : vector<2x8x8xf32>, vector<2x8x8xf32>, vector<2x8x8xf32> -> vector<2x8x8xf32>
    "tpu.trace_stop"() : () -> ()
    %cst_28 = arith.constant dense<0xFF800000> : vector<2x8xf32>
    %98 = vector.multi_reduction <maximumf>, %97, %cst_28 [2] : vector<2x8x8xf32> to vector<2x8xf32>
    %99 = vector.shape_cast %98 : vector<2x8xf32> to vector<2x8x1xf32>
    %100 = vector.broadcast %99 : vector<2x8x1xf32> to vector<2x8x8xf32>
    %101 = arith.subf %97, %100 : vector<2x8x8xf32>
    %102 = math.exp %101 : vector<2x8x8xf32>
    %cst_29 = arith.constant dense<0.000000e+00> : vector<2x8xf32>
    %103 = vector.multi_reduction <add>, %102, %cst_29 [2] : vector<2x8x8xf32> to vector<2x8xf32>
    %104 = vector.shape_cast %103 : vector<2x8xf32> to vector<2x8x1xf32>
    %105 = tpu.reciprocal %104 {approx = true} : vector<2x8x1xf32> -> vector<2x8x1xf32>
    %106 = vector.broadcast %105 : vector<2x8x1xf32> to vector<2x8x8xf32>
    %107 = arith.mulf %102, %106 : vector<2x8x8xf32>
    %108 = vector.extract_strided_slice %35 {offsets = [0, 0, 24], sizes = [2, 8, 8], strides = [1, 1, 1]} : vector<2x8x32xf32> to vector<2x8x8xf32>
    "tpu.trace_start"() <{level = 10 : i32, message = "bqk,bkd->bqd"}> : () -> ()
    %cst_30 = arith.constant dense<0.000000e+00> : vector<2x8x8xf32>
    %109 = tpu.matmul %107, %108, %cst_30 {dimension_numbers = #tpu.dot_dimension_numbers<[2], [1], [1], [2], [0, 0, 0, 1, 1, 2], [0], [0]>} : vector<2x8x8xf32>, vector<2x8x8xf32>, vector<2x8x8xf32> -> vector<2x8x8xf32>
    "tpu.trace_stop"() : () -> ()
    %110 = vector.shape_cast %109 : vector<2x8x8xf32> to vector<16x8xf32>
    %111 = vector.extract_strided_slice %36 {offsets = [24, 0], sizes = [8, 32], strides = [1, 1]} : vector<32x32xf32> to vector<8x32xf32>
    %cst_31 = arith.constant dense<0.000000e+00> : vector<16x32xf32>
    %112 = tpu.matmul %110, %111, %cst_31 {dimension_numbers = #tpu.dot_dimension_numbers<[1], [0], [0], [1], [0, 0, 1, 1], [], []>} : vector<16x8xf32>, vector<8x32xf32>, vector<16x32xf32> -> vector<16x32xf32>
    %113 = arith.addf %94, %112 : vector<16x32xf32>
    %114 = arith.addf %21, %113 : vector<16x32xf32>
    %cst_32 = arith.constant dense<0.000000e+00> : vector<16xf32>
    %115 = vector.multi_reduction <add>, %114, %cst_32 [1] : vector<16x32xf32> to vector<16xf32>
    %116 = vector.shape_cast %115 : vector<16xf32> to vector<16x1xf32>
    %cst_33 = arith.constant 3.200000e+01 : f32
    %117 = vector.broadcast %cst_33 : f32 to vector<16x1xf32>
    %118 = arith.divf %116, %117 : vector<16x1xf32>
    %119 = vector.broadcast %118 : vector<16x1xf32> to vector<16x32xf32>
    %120 = arith.subf %114, %119 : vector<16x32xf32>
    %121 = arith.mulf %120, %120 : vector<16x32xf32>
    %cst_34 = arith.constant dense<0.000000e+00> : vector<16xf32>
    %122 = vector.multi_reduction <add>, %121, %cst_34 [1] : vector<16x32xf32> to vector<16xf32>
    %123 = vector.shape_cast %122 : vector<16xf32> to vector<16x1xf32>
    %cst_35 = arith.constant 3.200000e+01 : f32
    %124 = vector.broadcast %cst_35 : f32 to vector<16x1xf32>
    %125 = arith.divf %123, %124 : vector<16x1xf32>
    %126 = vector.broadcast %118 : vector<16x1xf32> to vector<16x32xf32>
    %127 = arith.subf %114, %126 : vector<16x32xf32>
    %cst_36 = arith.constant 9.99999996E-13 : f32
    %128 = vector.broadcast %cst_36 : f32 to vector<16x1xf32>
    %129 = arith.addf %125, %128 : vector<16x1xf32>
    %130 = math.rsqrt %129 : vector<16x1xf32>
    %131 = vector.broadcast %130 : vector<16x1xf32> to vector<16x32xf32>
    %132 = arith.mulf %127, %131 : vector<16x32xf32>
    %133 = vector.broadcast %5 : vector<1x32xf32> to vector<16x32xf32>
    %134 = arith.mulf %132, %133 : vector<16x32xf32>
    %135 = vector.broadcast %6 : vector<1x32xf32> to vector<16x32xf32>
    %136 = arith.addf %134, %135 : vector<16x32xf32>
    %c0_37 = arith.constant 0 : index
    %c0_38 = arith.constant 0 : index
    %137 = vector.load %arg5[%c0_37, %c0_38] : memref<32x64xf32, #tpu.memory_space<vmem>>, vector<32x64xf32>
    %cst_39 = arith.constant dense<0.000000e+00> : vector<16x64xf32>
    %138 = tpu.matmul %136, %137, %cst_39 {dimension_numbers = #tpu.dot_dimension_numbers<[1], [0], [0], [1], [0, 0, 1, 1], [], []>} : vector<16x32xf32>, vector<32x64xf32>, vector<16x64xf32> -> vector<16x64xf32>
    %139 = vector.broadcast %7 : vector<1x64xf32> to vector<16x64xf32>
    %140 = arith.addf %138, %139 : vector<16x64xf32>
    %141 = arith.mulf %140, %140 : vector<16x64xf32>
    %142 = arith.mulf %140, %141 : vector<16x64xf32>
    %cst_40 = arith.constant 4.471500e-02 : f32
    %143 = vector.broadcast %cst_40 : f32 to vector<16x64xf32>
    %144 = arith.mulf %143, %142 : vector<16x64xf32>
    %145 = arith.addf %140, %144 : vector<16x64xf32>
    %cst_41 = arith.constant 0.797884583 : f32
    %146 = vector.broadcast %cst_41 : f32 to vector<16x64xf32>
    %147 = arith.mulf %146, %145 : vector<16x64xf32>
    %148 = math.tanh %147 : vector<16x64xf32>
    %cst_42 = arith.constant 1.000000e+00 : f32
    %149 = vector.broadcast %cst_42 : f32 to vector<16x64xf32>
    %150 = arith.addf %149, %148 : vector<16x64xf32>
    %cst_43 = arith.constant 5.000000e-01 : f32
    %151 = vector.broadcast %cst_43 : f32 to vector<16x64xf32>
    %152 = arith.mulf %151, %150 : vector<16x64xf32>
    %153 = arith.mulf %140, %152 : vector<16x64xf32>
    %c0_44 = arith.constant 0 : index
    %c0_45 = arith.constant 0 : index
    %154 = vector.load %arg6[%c0_44, %c0_45] : memref<64x32xf32, #tpu.memory_space<vmem>>, vector<64x32xf32>
    %cst_46 = arith.constant dense<0.000000e+00> : vector<16x32xf32>
    %155 = tpu.matmul %153, %154, %cst_46 {dimension_numbers = #tpu.dot_dimension_numbers<[1], [0], [0], [1], [0, 0, 1, 1], [], []>} : vector<16x64xf32>, vector<64x32xf32>, vector<16x32xf32> -> vector<16x32xf32>
    %156 = vector.broadcast %8 : vector<1x32xf32> to vector<16x32xf32>
    %157 = arith.addf %155, %156 : vector<16x32xf32>
    %158 = arith.addf %136, %157 : vector<16x32xf32>
    %cst_47 = arith.constant dense<0.000000e+00> : vector<16xf32>
    %159 = vector.multi_reduction <add>, %158, %cst_47 [1] : vector<16x32xf32> to vector<16xf32>
    %160 = vector.shape_cast %159 : vector<16xf32> to vector<16x1xf32>
    %cst_48 = arith.constant 3.200000e+01 : f32
    %161 = vector.broadcast %cst_48 : f32 to vector<16x1xf32>
    %162 = arith.divf %160, %161 : vector<16x1xf32>
    %163 = vector.broadcast %162 : vector<16x1xf32> to vector<16x32xf32>
    %164 = arith.subf %158, %163 : vector<16x32xf32>
    %165 = arith.mulf %164, %164 : vector<16x32xf32>
    %cst_49 = arith.constant dense<0.000000e+00> : vector<16xf32>
    %166 = vector.multi_reduction <add>, %165, %cst_49 [1] : vector<16x32xf32> to vector<16xf32>
    %167 = vector.shape_cast %166 : vector<16xf32> to vector<16x1xf32>
    %cst_50 = arith.constant 3.200000e+01 : f32
    %168 = vector.broadcast %cst_50 : f32 to vector<16x1xf32>
    %169 = arith.divf %167, %168 : vector<16x1xf32>
    %170 = vector.broadcast %162 : vector<16x1xf32> to vector<16x32xf32>
    %171 = arith.subf %158, %170 : vector<16x32xf32>
    %cst_51 = arith.constant 9.99999996E-13 : f32
    %172 = vector.broadcast %cst_51 : f32 to vector<16x1xf32>
    %173 = arith.addf %169, %172 : vector<16x1xf32>
    %174 = math.rsqrt %173 : vector<16x1xf32>
    %175 = vector.broadcast %174 : vector<16x1xf32> to vector<16x32xf32>
    %176 = arith.mulf %171, %175 : vector<16x32xf32>
    %177 = vector.broadcast %9 : vector<1x32xf32> to vector<16x32xf32>
    %178 = arith.mulf %176, %177 : vector<16x32xf32>
    %179 = vector.broadcast %10 : vector<1x32xf32> to vector<16x32xf32>
    %180 = arith.addf %178, %179 : vector<16x32xf32>
    %c0_52 = arith.constant 0 : index
    %c0_53 = arith.constant 0 : index
    %181 = vector.load %arg7[%c0_52, %c0_53] : memref<32x128xf32, #tpu.memory_space<vmem>>, vector<32x128xf32>
    %cst_54 = arith.constant dense<0.000000e+00> : vector<16x128xf32>
    %182 = tpu.matmul %180, %181, %cst_54 {dimension_numbers = #tpu.dot_dimension_numbers<[1], [0], [0], [1], [0, 0, 1, 1], [], []>} : vector<16x32xf32>, vector<32x128xf32>, vector<16x128xf32> -> vector<16x128xf32>
    %183 = vector.broadcast %11 : vector<1x128xf32> to vector<16x128xf32>
    %184 = arith.addf %182, %183 : vector<16x128xf32>
    %c0_55 = arith.constant 0 : index
    %c0_56 = arith.constant 0 : index
    %185 = vector.load %arg9[%c0_55, %c0_56] : memref<16x128xf32, #tpu.memory_space<vmem>>, vector<16x128xf32>
    tpu.vector_store %arg9[%c0_55, %c0_56], %184 {strides = array<i32>} : memref<16x128xf32, #tpu.memory_space<vmem>>, vector<16x128xf32>,
    return
  }
}

</mosaic_0001>

<llo_original>
// kernel: transformer_model_forward.1
$region0: #{transformer_model_forward.1}
  #allocation0 [shape = 'u32[]', space=smem, size = 0x4, offset = 0x4, fixed_abs, tag = 'smem constant byte address 0x4 - core index']
  #allocation1 [shape = 'u32[144,128]{1,0:T(1,128)}', space=vmem, size = 0x12000, scoped, tag = 'internal scratch']
  %s0 = inlined_call_operand.vmem [shape: s32[16,1], index: 0, kind: input, shape index: {}]
  %s1 = inlined_call_operand.vmem [shape: f32[128,32], index: 1, kind: input, shape index: {}]
  %s2 = inlined_call_operand.vmem [shape: f32[16,32], index: 2, kind: input, shape index: {}]
  %s3 = inlined_call_operand.vmem [shape: f32[32,384], index: 3, kind: input, shape index: {}]
  %s4 = inlined_call_operand.vmem [shape: f32[32,32], index: 4, kind: input, shape index: {}]
  %s5 = inlined_call_operand.vmem [shape: f32[32,64], index: 5, kind: input, shape index: {}]
  %s6 = inlined_call_operand.vmem [shape: f32[64,32], index: 6, kind: input, shape index: {}]
  %s7 = inlined_call_operand.vmem [shape: f32[32,128], index: 7, kind: input, shape index: {}]
  %s8 = inlined_call_operand.vmem [shape: f32[11,128], index: 8, kind: input, shape index: {}]
  %s9 = inlined_call_operand.vmem [shape: f32[16,128], index: 9, kind: output, shape index: {}]
  %s10 = sld [smem:[#allocation0]]
  $region46: #{transformer_model_forward.1} parent=0
    _
  %s12 = ssub.s32 1, %s10
  %s13 = scalar_select 0, %s12, %s10
  // Predicated region
  $region2: #{transformer_model_forward.1} parent=0 // pred_check
    _
  $region3: #{transformer_model_forward.1} parent=0 // pred_check_branch
    %15 = sbr.rel (0) target = $region5
  $region4: #{transformer_model_forward.1} parent=0 // pred_region
    _
  $region5: #{transformer_model_forward.1} parent=0 // pred_fallthru
    _
  // Predicated region
  $region6: #{transformer_model_forward.1} parent=0 // pred_check
    _
  $region7: #{transformer_model_forward.1} parent=0 // pred_check_branch
    %17 = sbr.rel (0) target = $region9
  $region8: #{transformer_model_forward.1} parent=0 // pred_region
    _
  $region9: #{transformer_model_forward.1} parent=0 // pred_fallthru
    _
  // Predicated region
  $region10: #{transformer_model_forward.1} parent=0 // pred_check
    _
  $region11: #{transformer_model_forward.1} parent=0 // pred_check_branch
    %19 = sbr.rel (0) target = $region13
  $region12: #{transformer_model_forward.1} parent=0 // pred_region
    _
  $region13: #{transformer_model_forward.1} parent=0 // pred_fallthru
    _
  // Predicated region
  $region14: #{transformer_model_forward.1} parent=0 // pred_check
    _
  $region15: #{transformer_model_forward.1} parent=0 // pred_check_branch
    %21 = sbr.rel (0) target = $region17
  $region16: #{transformer_model_forward.1} parent=0 // pred_region
    _
  $region17: #{transformer_model_forward.1} parent=0 // pred_fallthru
    _
  // Predicated region
  $region18: #{transformer_model_forward.1} parent=0 // pred_check
    _
  $region19: #{transformer_model_forward.1} parent=0 // pred_check_branch
    %23 = sbr.rel (0) target = $region21
  $region20: #{transformer_model_forward.1} parent=0 // pred_region
    _
  $region21: #{transformer_model_forward.1} parent=0 // pred_fallthru
    _
  // Predicated region
  $region22: #{transformer_model_forward.1} parent=0 // pred_check
    _
  $region23: #{transformer_model_forward.1} parent=0 // pred_check_branch
    %25 = sbr.rel (0) target = $region25
  $region24: #{transformer_model_forward.1} parent=0 // pred_region
    _
  $region25: #{transformer_model_forward.1} parent=0 // pred_fallthru
    _
  // Predicated region
  $region26: #{transformer_model_forward.1} parent=0 // pred_check
    _
  $region27: #{transformer_model_forward.1} parent=0 // pred_check_branch
    %27 = sbr.rel (0) target = $region29
  $region28: #{transformer_model_forward.1} parent=0 // pred_region
    _
  $region29: #{transformer_model_forward.1} parent=0 // pred_fallthru
    _
  // Predicated region
  $region30: #{transformer_model_forward.1} parent=0 // pred_check
    _
  $region31: #{transformer_model_forward.1} parent=0 // pred_check_branch
    %29 = sbr.rel (0) target = $region33
  $region32: #{transformer_model_forward.1} parent=0 // pred_region
    _
  $region33: #{transformer_model_forward.1} parent=0 // pred_fallthru
    _
  // Predicated region
  $region34: #{transformer_model_forward.1} parent=0 // pred_check
    _
  $region35: #{transformer_model_forward.1} parent=0 // pred_check_branch
    %31 = sbr.rel (0) target = $region37
  $region36: #{transformer_model_forward.1} parent=0 // pred_region
    _
  $region37: #{transformer_model_forward.1} parent=0 // pred_fallthru
    _
  %v32 = vld [vmem:[%s8] sm:$0xff]
  %v33 = vld [vmem:[%s8 + $0x8] sm:$0x7]
  %v34 = vld [vmem:[%s0] sm:$0xff]
  %v35 = vld [vmem:[%s0 + $0x8] sm:$0xff]
  %v36 = vlaneseq
  %v37 = vand.u32 %v36, 127
  %38 = vset.pattern.permute.xlu0 0
  %39 = vperm.xlu0 %38, %v34
  %v40 = vpop.permute.xlu0 %39
  %41 = vset.pattern.permute.xlu0 0
  %42 = vperm.xlu0 %41, %v35
  %v43 = vpop.permute.xlu0 %42
  %vm44 = vcmp.eq.s32.totalorder %v37, %v40
  %vm45 = vcmp.eq.s32.totalorder %v37, %v43
  %v46 = vsel %vm44, 1, 0
  %v47 = vsel %vm45, 1, 0
  %v48 = vcvt.s32.f32 %v46
  %v49 = vcvt.s32.f32 %v47
  %v50 = vld [vmem:[%s1] sm:$0xff]
  %v51 = vld [vmem:[%s1 + $0x8] sm:$0xff]
  %v52 = vld [vmem:[%s1 + $0x10] sm:$0xff]
  %v53 = vld [vmem:[%s1 + $0x18] sm:$0xff]
  %v54 = vld [vmem:[%s1 + $0x20] sm:$0xff]
  %v55 = vld [vmem:[%s1 + $0x28] sm:$0xff]
  %v56 = vld [vmem:[%s1 + $0x30] sm:$0xff]
  %v57 = vld [vmem:[%s1 + $0x38] sm:$0xff]
  %v58 = vld [vmem:[%s1 + $0x40] sm:$0xff]
  %v59 = vld [vmem:[%s1 + $0x48] sm:$0xff]
  %v60 = vld [vmem:[%s1 + $0x50] sm:$0xff]
  %v61 = vld [vmem:[%s1 + $0x58] sm:$0xff]
  %v62 = vld [vmem:[%s1 + $0x60] sm:$0xff]
  %v63 = vld [vmem:[%s1 + $0x68] sm:$0xff]
  %v64 = vld [vmem:[%s1 + $0x70] sm:$0xff]
  %v65 = vld [vmem:[%s1 + $0x78] sm:$0xff]
  %v66 = vld [vmem:[%s2] sm:$0xff]
  %v67 = vld [vmem:[%s2 + $0x8] sm:$0xff]
  %68 = vmatprep.subr.mxu0 0.0
  %69 = vmatpush1.msra.mxu0 %v50
  %70 = vmatprep.subr.mxu0 0.0
  %71 = vmatpush1.msra.mxu0 %v51
  %72 = vmatprep.subr.mxu0 0.0
  %73 = vmatpush1.msra.mxu0 %v52
  %74 = vmatprep.subr.mxu0 0.0
  %75 = vmatpush1.msra.mxu0 %v53
  %76 = vmatprep.subr.mxu0 0.0
  %77 = vmatpush1.msra.mxu0 %v54
  %78 = vmatprep.subr.mxu0 0.0
  %79 = vmatpush1.msra.mxu0 %v55
  %80 = vmatprep.subr.mxu0 0.0
  %81 = vmatpush1.msra.mxu0 %v56
  %82 = vmatprep.subr.mxu0 0.0
  %83 = vmatpush1.msra.mxu0 %v57
  %84 = vmatprep.subr.mxu0 0.0
  %85 = vmatpush1.msra.mxu0 %v58
  %86 = vmatprep.subr.mxu0 0.0
  %87 = vmatpush1.msra.mxu0 %v59
  %88 = vmatprep.subr.mxu0 0.0
  %89 = vmatpush1.msra.mxu0 %v60
  %90 = vmatprep.subr.mxu0 0.0
  %91 = vmatpush1.msra.mxu0 %v61
  %92 = vmatprep.subr.mxu0 0.0
  %93 = vmatpush1.msra.mxu0 %v62
  %94 = vmatprep.subr.mxu0 0.0
  %95 = vmatpush1.msra.mxu0 %v63
  %96 = vmatprep.subr.mxu0 0.0
  %97 = vmatpush1.msra.mxu0 %v64
  %98 = vmatprep.subr.mxu0 0.0
  %99 = vmatpush1.msra.mxu0 %v65
  %100 = vmatprep.subr.mxu0 0.0
  %101 = vmatpush1.msra.mxu0 0.0
  %102 = vmatprep.subr.mxu0 0.0
  %103 = vmatpush1.msra.mxu0 0.0
  %104 = vmatprep.subr.mxu0 0.0
  %105 = vmatpush1.msra.mxu0 0.0
  %106 = vmatprep.subr.mxu0 0.0
  %107 = vmatpush1.msra.mxu0 0.0
  %108 = vmatprep.subr.mxu0 0.0
  %109 = vmatpush1.msra.mxu0 0.0
  %110 = vmatprep.subr.mxu0 0.0
  %111 = vmatpush1.msra.mxu0 0.0
  %112 = vmatprep.subr.mxu0 0.0
  %113 = vmatpush1.msra.mxu0 0.0
  %114 = vmatprep.subr.mxu0 0.0
  %115 = vmatpush1.msra.mxu0 0.0
  %116 = vmatprep.subr.mxu0 0.0
  %117 = vmatpush1.msra.mxu0 0.0
  %118 = vmatprep.subr.mxu0 0.0
  %119 = vmatpush1.msra.mxu0 0.0
  %120 = vmatprep.subr.mxu0 0.0
  %121 = vmatpush1.msra.mxu0 0.0
  %122 = vmatprep.subr.mxu0 0.0
  %123 = vmatpush1.msra.mxu0 0.0
  %124 = vmatprep.subr.mxu0 0.0
  %125 = vmatpush1.msra.mxu0 0.0
  %126 = vmatprep.subr.mxu0 0.0
  %127 = vmatpush1.msra.mxu0 0.0
  %128 = vmatprep.subr.mxu0 0.0
  %129 = vmatpush1.msra.mxu0 0.0
  %130 = vmatprep.subr.mxu0 0.0
  %131 = vmatpush1.msra.mxu0 0.0
  %132 = vmatprep.mubr.f32.mxu0 0.0
  %133 = vmatmul.mubr.f32.gmra.mrb[0].mxu0 %v48
  %v134 = vpop.f32.mrb[0].mxu0
  %v135 = vadd.f32 %v66, %v134
  %v136 = vpop.f32.mrb[0].mxu0
  %137 = vmatprep.mubr.f32.mxu0 0.0
  %138 = vmatmul.mubr.f32.gmra.mrb[0].mxu0 %v49
  %v139 = vpop.f32.mrb[0].mxu0
  %v140 = vadd.f32 %v67, %v139
  %v141 = vpop.f32.mrb[0].mxu0
  %142 = vdwg.mxu0
  %v143 = vld [vmem:[%s3] sm:$0xff]
  %v144 = vld [vmem:[%s3 + $0x8] sm:$0xff]
  %v145 = vld [vmem:[%s3 + $0x10] sm:$0xff]
  %v146 = vld [vmem:[%s3 + $0x18] sm:$0xff]
  %v147 = vld [vmem:[%s3 + $0x20] sm:$0xff]
  %v148 = vld [vmem:[%s3 + $0x28] sm:$0xff]
  %v149 = vld [vmem:[%s3 + $0x30] sm:$0xff]
  %v150 = vld [vmem:[%s3 + $0x38] sm:$0xff]
  %v151 = vld [vmem:[%s3 + $0x40] sm:$0xff]
  %v152 = vld [vmem:[%s3 + $0x48] sm:$0xff]
  %v153 = vld [vmem:[%s3 + $0x50] sm:$0xff]
  %v154 = vld [vmem:[%s3 + $0x58] sm:$0xff]
  %vm155 = vcmask 261120
  %v157 = vsel %vm155, %v135, 0
  %v160 = vsel %vm155, %v140, 0
  %162 = vmatprep.subr.mxu0 %v144
  %163 = vmatpush1.msra.mxu0 %v143
  %164 = vmatprep.subr.mxu0 %v147
  %165 = vmatpush1.msra.mxu0 %v146
  %166 = vmatprep.subr.mxu0 %v150
  %167 = vmatpush1.msra.mxu0 %v149
  %168 = vmatprep.subr.mxu0 %v153
  %169 = vmatpush1.msra.mxu0 %v152
  %170 = vmatprep.subr.mxu0 0.0
  %171 = vmatpush1.msra.mxu0 0.0
  %172 = vmatprep.subr.mxu0 0.0
  %173 = vmatpush1.msra.mxu0 0.0
  %174 = vmatprep.subr.mxu0 0.0
  %175 = vmatpush1.msra.mxu0 0.0
  %176 = vmatprep.subr.mxu0 0.0
  %177 = vmatpush1.msra.mxu0 0.0
  %178 = vmatprep.subr.mxu0 0.0
  %179 = vmatpush1.msra.mxu0 0.0
  %180 = vmatprep.subr.mxu0 0.0
  %181 = vmatpush1.msra.mxu0 0.0
  %182 = vmatprep.subr.mxu0 0.0
  %183 = vmatpush1.msra.mxu0 0.0
  %184 = vmatprep.subr.mxu0 0.0
  %185 = vmatpush1.msra.mxu0 0.0
  %186 = vmatprep.subr.mxu0 0.0
  %187 = vmatpush1.msra.mxu0 0.0
  %188 = vmatprep.subr.mxu0 0.0
  %189 = vmatpush1.msra.mxu0 0.0
  %190 = vmatprep.subr.mxu0 0.0
  %191 = vmatpush1.msra.mxu0 0.0
  %192 = vmatprep.subr.mxu0 0.0
  %193 = vmatpush1.msra.mxu0 0.0
  %194 = vmatprep.subr.mxu0 0.0
  %195 = vmatpush1.msra.mxu0 0.0
  %196 = vmatprep.subr.mxu0 0.0
  %197 = vmatpush1.msra.mxu0 0.0
  %198 = vmatprep.subr.mxu0 0.0
  %199 = vmatpush1.msra.mxu0 0.0
  %200 = vmatprep.subr.mxu0 0.0
  %201 = vmatpush1.msra.mxu0 0.0
  %202 = vmatprep.subr.mxu0 0.0
  %203 = vmatpush1.msra.mxu0 0.0
  %204 = vmatprep.subr.mxu0 0.0
  %205 = vmatpush1.msra.mxu0 0.0
  %206 = vmatprep.subr.mxu0 0.0
  %207 = vmatpush1.msra.mxu0 0.0
  %208 = vmatprep.subr.mxu0 0.0
  %209 = vmatpush1.msra.mxu0 0.0
  %210 = vmatprep.subr.mxu0 0.0
  %211 = vmatpush1.msra.mxu0 0.0
  %212 = vmatprep.subr.mxu0 0.0
  %213 = vmatpush1.msra.mxu0 0.0
  %214 = vmatprep.subr.mxu0 0.0
  %215 = vmatpush1.msra.mxu0 0.0
  %216 = vmatprep.subr.mxu0 0.0
  %217 = vmatpush1.msra.mxu0 0.0
  %218 = vmatprep.subr.mxu0 0.0
  %219 = vmatpush1.msra.mxu0 0.0
  %220 = vmatprep.subr.mxu0 0.0
  %221 = vmatpush1.msra.mxu0 0.0
  %222 = vmatprep.subr.mxu0 0.0
  %223 = vmatpush1.msra.mxu0 0.0
  %224 = vmatprep.subr.mxu0 0.0
  %225 = vmatpush1.msra.mxu0 0.0
  %226 = vmatprep.mubr.f32.mxu0 0.0
  %227 = vmatmul.mubr.f32.gmra.mrb[0].mxu0 %v157
  %v228 = vpop.f32.mrb[0].mxu0
  %v229 = vadd.f32 0.0, %v228
  %v230 = vpop.f32.mrb[0].mxu0
  %v231 = vadd.f32 0.0, %v230
  %232 = vmatprep.mubr.f32.mxu0 0.0
  %233 = vmatmul.mubr.f32.gmra.mrb[0].mxu0 %v160
  %v234 = vpop.f32.mrb[0].mxu0
  %v235 = vadd.f32 0.0, %v234
  %v236 = vpop.f32.mrb[0].mxu0
  %v237 = vadd.f32 0.0, %v236
  %238 = vdwg.mxu0
  %239 = vmatprep.subr.mxu0 0.0
  %240 = vmatpush1.msra.mxu0 %v145
  %241 = vmatprep.subr.mxu0 0.0
  %242 = vmatpush1.msra.mxu0 %v148
  %243 = vmatprep.subr.mxu0 0.0
  %244 = vmatpush1.msra.mxu0 %v151
  %245 = vmatprep.subr.mxu0 0.0
  %246 = vmatpush1.msra.mxu0 %v154
  %247 = vmatprep.subr.mxu0 0.0
  %248 = vmatpush1.msra.mxu0 0.0
  %249 = vmatprep.subr.mxu0 0.0
  %250 = vmatpush1.msra.mxu0 0.0
  %251 = vmatprep.subr.mxu0 0.0
  %252 = vmatpush1.msra.mxu0 0.0
  %253 = vmatprep.subr.mxu0 0.0
  %254 = vmatpush1.msra.mxu0 0.0
  %255 = vmatprep.subr.mxu0 0.0
  %256 = vmatpush1.msra.mxu0 0.0
  %257 = vmatprep.subr.mxu0 0.0
  %258 = vmatpush1.msra.mxu0 0.0
  %259 = vmatprep.subr.mxu0 0.0
  %260 = vmatpush1.msra.mxu0 0.0
  %261 = vmatprep.subr.mxu0 0.0
  %262 = vmatpush1.msra.mxu0 0.0
  %263 = vmatprep.subr.mxu0 0.0
  %264 = vmatpush1.msra.mxu0 0.0
  %265 = vmatprep.subr.mxu0 0.0
  %266 = vmatpush1.msra.mxu0 0.0
  %267 = vmatprep.subr.mxu0 0.0
  %268 = vmatpush1.msra.mxu0 0.0
  %269 = vmatprep.subr.mxu0 0.0
  %270 = vmatpush1.msra.mxu0 0.0
  %271 = vmatprep.subr.mxu0 0.0
  %272 = vmatpush1.msra.mxu0 0.0
  %273 = vmatprep.subr.mxu0 0.0
  %274 = vmatpush1.msra.mxu0 0.0
  %275 = vmatprep.subr.mxu0 0.0
  %276 = vmatpush1.msra.mxu0 0.0
  %277 = vmatprep.subr.mxu0 0.0
  %278 = vmatpush1.msra.mxu0 0.0
  %279 = vmatprep.subr.mxu0 0.0
  %280 = vmatpush1.msra.mxu0 0.0
  %281 = vmatprep.subr.mxu0 0.0
  %282 = vmatpush1.msra.mxu0 0.0
  %283 = vmatprep.subr.mxu0 0.0
  %284 = vmatpush1.msra.mxu0 0.0
  %285 = vmatprep.subr.mxu0 0.0
  %286 = vmatpush1.msra.mxu0 0.0
  %287 = vmatprep.subr.mxu0 0.0
  %288 = vmatpush1.msra.mxu0 0.0
  %289 = vmatprep.subr.mxu0 0.0
  %290 = vmatpush1.msra.mxu0 0.0
  %291 = vmatprep.subr.mxu0 0.0
  %292 = vmatpush1.msra.mxu0 0.0
  %293 = vmatprep.subr.mxu0 0.0
  %294 = vmatpush1.msra.mxu0 0.0
  %295 = vmatprep.subr.mxu0 0.0
  %296 = vmatpush1.msra.mxu0 0.0
  %297 = vmatprep.subr.mxu0 0.0
  %298 = vmatpush1.msra.mxu0 0.0
  %299 = vmatprep.subr.mxu0 0.0
  %300 = vmatpush1.msra.mxu0 0.0
  %301 = vmatprep.subr.mxu0 0.0
  %302 = vmatpush1.msra.mxu0 0.0
  %303 = vmatprep.mubr.f32.mxu0 0.0
  %304 = vmatmul.mubr.f32.gmra.mrb[0].mxu0 %v157
  %v305 = vpop.f32.mrb[0].mxu0
  %v306 = vadd.f32 0.0, %v305
  %v307 = vpop.f32.mrb[0].mxu0
  %308 = vmatprep.mubr.f32.mxu0 0.0
  %309 = vmatmul.mubr.f32.gmra.mrb[0].mxu0 %v160
  %v310 = vpop.f32.mrb[0].mxu0
  %v311 = vadd.f32 0.0, %v310
  %v312 = vpop.f32.mrb[0].mxu0
  %313 = vdwg.mxu0
  %v314 = vlaneseq
  %v315 = vshrl.u32 %v314, 7
  %v316 = vsub.s32 0, %v315
  %v317 = vrot.slane %v32, %v316
  %v318 = vadd.f32 %v229, %v317
  %v319 = vadd.f32 %v235, %v317
  %v320 = vlaneseq
  %v321 = vshrl.u32 %v320, 7
  %v322 = vsub.s32 1, %v321
  %v323 = vrot.slane %v32, %v322
  %v324 = vadd.f32 %v231, %v323
  %v325 = vadd.f32 %v237, %v323
  %v326 = vlaneseq
  %v327 = vshrl.u32 %v326, 7
  %v328 = vsub.s32 2, %v327
  %v329 = vrot.slane %v32, %v328
  %v330 = vadd.f32 %v306, %v329
  %v331 = vadd.f32 %v311, %v329
  %v332 = vld [vmem:[%s4] sm:$0xff]
  %v333 = vld [vmem:[%s4 + $0x8] sm:$0xff]
  %v334 = vld [vmem:[%s4 + $0x10] sm:$0xff]
  %v335 = vld [vmem:[%s4 + $0x18] sm:$0xff]
  %vm336 = vcmask 64512
  %v338 = vsel %vm336, %v318, 0
  %v341 = vsel %vm336, %v324, 0
  %343 = vmatprep.subr.mxu0 0.0
  %344 = vmatpush1.xpose.msra.mxu0 %v341
  %345 = vmatprep.subr.mxu0 0.0
  %346 = vmatpush1.xpose.msra.mxu0 0.0
  %347 = vmatprep.subr.mxu0 0.0
  %348 = vmatpush1.xpose.msra.mxu0 0.0
  %349 = vmatprep.subr.mxu0 0.0
  %350 = vmatpush1.xpose.msra.mxu0 0.0
  %351 = vmatprep.subr.mxu0 0.0
  %352 = vmatpush1.xpose.msra.mxu0 0.0
  %353 = vmatprep.subr.mxu0 0.0
  %354 = vmatpush1.xpose.msra.mxu0 0.0
  %355 = vmatprep.subr.mxu0 0.0
  %356 = vmatpush1.xpose.msra.mxu0 0.0
  %357 = vmatprep.subr.mxu0 0.0
  %358 = vmatpush1.xpose.msra.mxu0 0.0
  %359 = vmatprep.subr.mxu0 0.0
  %360 = vmatpush1.xpose.msra.mxu0 0.0
  %361 = vmatprep.subr.mxu0 0.0
  %362 = vmatpush1.xpose.msra.mxu0 0.0
  %363 = vmatprep.subr.mxu0 0.0
  %364 = vmatpush1.xpose.msra.mxu0 0.0
  %365 = vmatprep.subr.mxu0 0.0
  %366 = vmatpush1.xpose.msra.mxu0 0.0
  %367 = vmatprep.subr.mxu0 0.0
  %368 = vmatpush1.xpose.msra.mxu0 0.0
  %369 = vmatprep.subr.mxu0 0.0
  %370 = vmatpush1.xpose.msra.mxu0 0.0
  %371 = vmatprep.subr.mxu0 0.0
  %372 = vmatpush1.xpose.msra.mxu0 0.0
  %373 = vmatprep.subr.mxu0 0.0
  %374 = vmatpush1.xpose.msra.mxu0 0.0
  %375 = vmatprep.subr.mxu0 0.0
  %376 = vmatpush1.xpose.msra.mxu0 0.0
  %377 = vmatprep.subr.mxu0 0.0
  %378 = vmatpush1.xpose.msra.mxu0 0.0
  %379 = vmatprep.subr.mxu0 0.0
  %380 = vmatpush1.xpose.msra.mxu0 0.0
  %381 = vmatprep.subr.mxu0 0.0
  %382 = vmatpush1.xpose.msra.mxu0 0.0
  %383 = vmatprep.subr.mxu0 0.0
  %384 = vmatpush1.xpose.msra.mxu0 0.0
  %385 = vmatprep.subr.mxu0 0.0
  %386 = vmatpush1.xpose.msra.mxu0 0.0
  %387 = vmatprep.subr.mxu0 0.0
  %388 = vmatpush1.xpose.msra.mxu0 0.0
  %389 = vmatprep.subr.mxu0 0.0
  %390 = vmatpush1.xpose.msra.mxu0 0.0
  %391 = vmatprep.subr.mxu0 0.0
  %392 = vmatpush1.xpose.msra.mxu0 0.0
  %393 = vmatprep.subr.mxu0 0.0
  %394 = vmatpush1.xpose.msra.mxu0 0.0
  %395 = vmatprep.subr.mxu0 0.0
  %396 = vmatpush1.xpose.msra.mxu0 0.0
  %397 = vmatprep.subr.mxu0 0.0
  %398 = vmatpush1.xpose.msra.mxu0 0.0
  %399 = vmatprep.subr.mxu0 0.0
  %400 = vmatpush1.xpose.msra.mxu0 0.0
  %401 = vmatprep.subr.mxu0 0.0
  %402 = vmatpush1.xpose.msra.mxu0 0.0
  %403 = vmatprep.subr.mxu0 0.0
  %404 = vmatpush1.xpose.msra.mxu0 0.0
  %405 = vmatprep.subr.mxu0 0.0
  %406 = vmatpush1.xpose.msra.mxu0 0.0
  %407 = vmatprep.mubr.f32.mxu0 0.0
  %408 = vmatmul.mubr.f32.gmra.mrb[0].mxu0 %v338
  %v409 = vpop.f32.mrb[0].mxu0
  %v410 = vadd.f32 0.0, %v409
  %v411 = vpop.f32.mrb[0].mxu0
  %412 = vdwg.mxu0
  %v414 = vsel %vm336, %v319, 0
  %v417 = vsel %vm336, %v325, 0
  %419 = vmatprep.subr.mxu0 0.0
  %420 = vmatpush1.xpose.msra.mxu0 %v417
  %421 = vmatprep.subr.mxu0 0.0
  %422 = vmatpush1.xpose.msra.mxu0 0.0
  %423 = vmatprep.subr.mxu0 0.0
  %424 = vmatpush1.xpose.msra.mxu0 0.0
  %425 = vmatprep.subr.mxu0 0.0
  %426 = vmatpush1.xpose.msra.mxu0 0.0
  %427 = vmatprep.subr.mxu0 0.0
  %428 = vmatpush1.xpose.msra.mxu0 0.0
  %429 = vmatprep.subr.mxu0 0.0
  %430 = vmatpush1.xpose.msra.mxu0 0.0
  %431 = vmatprep.subr.mxu0 0.0
  %432 = vmatpush1.xpose.msra.mxu0 0.0
  %433 = vmatprep.subr.mxu0 0.0
  %434 = vmatpush1.xpose.msra.mxu0 0.0
  %435 = vmatprep.subr.mxu0 0.0
  %436 = vmatpush1.xpose.msra.mxu0 0.0
  %437 = vmatprep.subr.mxu0 0.0
  %438 = vmatpush1.xpose.msra.mxu0 0.0
  %439 = vmatprep.subr.mxu0 0.0
  %440 = vmatpush1.xpose.msra.mxu0 0.0
  %441 = vmatprep.subr.mxu0 0.0
  %442 = vmatpush1.xpose.msra.mxu0 0.0
  %443 = vmatprep.subr.mxu0 0.0
  %444 = vmatpush1.xpose.msra.mxu0 0.0
  %445 = vmatprep.subr.mxu0 0.0
  %446 = vmatpush1.xpose.msra.mxu0 0.0
  %447 = vmatprep.subr.mxu0 0.0
  %448 = vmatpush1.xpose.msra.mxu0 0.0
  %449 = vmatprep.subr.mxu0 0.0
  %450 = vmatpush1.xpose.msra.mxu0 0.0
  %451 = vmatprep.subr.mxu0 0.0
  %452 = vmatpush1.xpose.msra.mxu0 0.0
  %453 = vmatprep.subr.mxu0 0.0
  %454 = vmatpush1.xpose.msra.mxu0 0.0
  %455 = vmatprep.subr.mxu0 0.0
  %456 = vmatpush1.xpose.msra.mxu0 0.0
  %457 = vmatprep.subr.mxu0 0.0
  %458 = vmatpush1.xpose.msra.mxu0 0.0
  %459 = vmatprep.subr.mxu0 0.0
  %460 = vmatpush1.xpose.msra.mxu0 0.0
  %461 = vmatprep.subr.mxu0 0.0
  %462 = vmatpush1.xpose.msra.mxu0 0.0
  %463 = vmatprep.subr.mxu0 0.0
  %464 = vmatpush1.xpose.msra.mxu0 0.0
  %465 = vmatprep.subr.mxu0 0.0
  %466 = vmatpush1.xpose.msra.mxu0 0.0
  %467 = vmatprep.subr.mxu0 0.0
  %468 = vmatpush1.xpose.msra.mxu0 0.0
  %469 = vmatprep.subr.mxu0 0.0
  %470 = vmatpush1.xpose.msra.mxu0 0.0
  %471 = vmatprep.subr.mxu0 0.0
  %472 = vmatpush1.xpose.msra.mxu0 0.0
  %473 = vmatprep.subr.mxu0 0.0
  %474 = vmatpush1.xpose.msra.mxu0 0.0
  %475 = vmatprep.subr.mxu0 0.0
  %476 = vmatpush1.xpose.msra.mxu0 0.0
  %477 = vmatprep.subr.mxu0 0.0
  %478 = vmatpush1.xpose.msra.mxu0 0.0
  %479 = vmatprep.subr.mxu0 0.0
  %480 = vmatpush1.xpose.msra.mxu0 0.0
  %481 = vmatprep.subr.mxu0 0.0
  %482 = vmatpush1.xpose.msra.mxu0 0.0
  %483 = vmatprep.mubr.f32.mxu0 0.0
  %484 = vmatmul.mubr.f32.gmra.mrb[0].mxu0 %v414
  %v485 = vpop.f32.mrb[0].mxu0
  %v486 = vadd.f32 0.0, %v485
  %v487 = vpop.f32.mrb[0].mxu0
  %488 = vdwg.mxu0
  %v489 = vsel %vm336, %v410, -inf
  %490 = vmax.xlane.f32.xlu0 %v489
  %v491 = vpop.xlane.xlu0 %490
  %v492 = vsel %vm336, %v486, -inf
  %493 = vmax.xlane.f32.xlu0 %v492
  %v494 = vpop.xlane.xlu0 %493
  %v495 = vsub.f32 %v410, %v491
  %v496 = vsub.f32 %v486, %v494
  %v497 = vmul.f32 %v495, 1.442695
  %v498 = vpow.pop %v497
  %v499 = vmul.f32 %v496, 1.442695
  %v500 = vpow.pop %v499
  %v501 = vsel %vm336, %v498, 0.0
  %502 = vadd.xlane.f32.xlu0 %v501
  %v503 = vpop.xlane.xlu0 %502
  %v504 = vsel %vm336, %v500, 0.0
  %505 = vadd.xlane.f32.xlu0 %v504
  %v506 = vpop.xlane.xlu0 %505
  %v507 = vrcp.pop %v503
  %v508 = vrcp.pop %v506
  %v509 = vmul.f32 %v498, %v507
  %v510 = vmul.f32 %v500, %v508
  %v512 = vsel %vm336, %v509, 0
  %514 = vmatprep.subr.mxu0 0.0
  %515 = vmatpush1.msra.mxu0 %v330
  %516 = vmatprep.subr.mxu0 0.0
  %517 = vmatpush1.msra.mxu0 0.0
  %518 = vmatprep.subr.mxu0 0.0
  %519 = vmatpush1.msra.mxu0 0.0
  %520 = vmatprep.subr.mxu0 0.0
  %521 = vmatpush1.msra.mxu0 0.0
  %522 = vmatprep.subr.mxu0 0.0
  %523 = vmatpush1.msra.mxu0 0.0
  %524 = vmatprep.subr.mxu0 0.0
  %525 = vmatpush1.msra.mxu0 0.0
  %526 = vmatprep.subr.mxu0 0.0
  %527 = vmatpush1.msra.mxu0 0.0
  %528 = vmatprep.subr.mxu0 0.0
  %529 = vmatpush1.msra.mxu0 0.0
  %530 = vmatprep.subr.mxu0 0.0
  %531 = vmatpush1.msra.mxu0 0.0
  %532 = vmatprep.subr.mxu0 0.0
  %533 = vmatpush1.msra.mxu0 0.0
  %534 = vmatprep.subr.mxu0 0.0
  %535 = vmatpush1.msra.mxu0 0.0
  %536 = vmatprep.subr.mxu0 0.0
  %537 = vmatpush1.msra.mxu0 0.0
  %538 = vmatprep.subr.mxu0 0.0
  %539 = vmatpush1.msra.mxu0 0.0
  %540 = vmatprep.subr.mxu0 0.0
  %541 = vmatpush1.msra.mxu0 0.0
  %542 = vmatprep.subr.mxu0 0.0
  %543 = vmatpush1.msra.mxu0 0.0
  %544 = vmatprep.subr.mxu0 0.0
  %545 = vmatpush1.msra.mxu0 0.0
  %546 = vmatprep.subr.mxu0 0.0
  %547 = vmatpush1.msra.mxu0 0.0
  %548 = vmatprep.subr.mxu0 0.0
  %549 = vmatpush1.msra.mxu0 0.0
  %550 = vmatprep.subr.mxu0 0.0
  %551 = vmatpush1.msra.mxu0 0.0
  %552 = vmatprep.subr.mxu0 0.0
  %553 = vmatpush1.msra.mxu0 0.0
  %554 = vmatprep.subr.mxu0 0.0
  %555 = vmatpush1.msra.mxu0 0.0
  %556 = vmatprep.subr.mxu0 0.0
  %557 = vmatpush1.msra.mxu0 0.0
  %558 = vmatprep.subr.mxu0 0.0
  %559 = vmatpush1.msra.mxu0 0.0
  %560 = vmatprep.subr.mxu0 0.0
  %561 = vmatpush1.msra.mxu0 0.0
  %562 = vmatprep.subr.mxu0 0.0
  %563 = vmatpush1.msra.mxu0 0.0
  %564 = vmatprep.subr.mxu0 0.0
  %565 = vmatpush1.msra.mxu0 0.0
  %566 = vmatprep.subr.mxu0 0.0
  %567 = vmatpush1.msra.mxu0 0.0
  %568 = vmatprep.subr.mxu0 0.0
  %569 = vmatpush1.msra.mxu0 0.0
  %570 = vmatprep.subr.mxu0 0.0
  %571 = vmatpush1.msra.mxu0 0.0
  %572 = vmatprep.subr.mxu0 0.0
  %573 = vmatpush1.msra.mxu0 0.0
  %574 = vmatprep.subr.mxu0 0.0
  %575 = vmatpush1.msra.mxu0 0.0
  %576 = vmatprep.subr.mxu0 0.0
  %577 = vmatpush1.msra.mxu0 0.0
  %578 = vmatprep.mubr.f32.mxu0 0.0
  %579 = vmatmul.mubr.f32.gmra.mrb[0].mxu0 %v512
  %v580 = vpop.f32.mrb[0].mxu0
  %v581 = vadd.f32 0.0, %v580
  %v582 = vpop.f32.mrb[0].mxu0
  %583 = vdwg.mxu0
  %v585 = vsel %vm336, %v510, 0
  %587 = vmatprep.subr.mxu0 0.0
  %588 = vmatpush1.msra.mxu0 %v331
  %589 = vmatprep.subr.mxu0 0.0
  %590 = vmatpush1.msra.mxu0 0.0
  %591 = vmatprep.subr.mxu0 0.0
  %592 = vmatpush1.msra.mxu0 0.0
  %593 = vmatprep.subr.mxu0 0.0
  %594 = vmatpush1.msra.mxu0 0.0
  %595 = vmatprep.subr.mxu0 0.0
  %596 = vmatpush1.msra.mxu0 0.0
  %597 = vmatprep.subr.mxu0 0.0
  %598 = vmatpush1.msra.mxu0 0.0
  %599 = vmatprep.subr.mxu0 0.0
  %600 = vmatpush1.msra.mxu0 0.0
  %601 = vmatprep.subr.mxu0 0.0
  %602 = vmatpush1.msra.mxu0 0.0
  %603 = vmatprep.subr.mxu0 0.0
  %604 = vmatpush1.msra.mxu0 0.0
  %605 = vmatprep.subr.mxu0 0.0
  %606 = vmatpush1.msra.mxu0 0.0
  %607 = vmatprep.subr.mxu0 0.0
  %608 = vmatpush1.msra.mxu0 0.0
  %609 = vmatprep.subr.mxu0 0.0
  %610 = vmatpush1.msra.mxu0 0.0
  %611 = vmatprep.subr.mxu0 0.0
  %612 = vmatpush1.msra.mxu0 0.0
  %613 = vmatprep.subr.mxu0 0.0
  %614 = vmatpush1.msra.mxu0 0.0
  %615 = vmatprep.subr.mxu0 0.0
  %616 = vmatpush1.msra.mxu0 0.0
  %617 = vmatprep.subr.mxu0 0.0
  %618 = vmatpush1.msra.mxu0 0.0
  %619 = vmatprep.subr.mxu0 0.0
  %620 = vmatpush1.msra.mxu0 0.0
  %621 = vmatprep.subr.mxu0 0.0
  %622 = vmatpush1.msra.mxu0 0.0
  %623 = vmatprep.subr.mxu0 0.0
  %624 = vmatpush1.msra.mxu0 0.0
  %625 = vmatprep.subr.mxu0 0.0
  %626 = vmatpush1.msra.mxu0 0.0
  %627 = vmatprep.subr.mxu0 0.0
  %628 = vmatpush1.msra.mxu0 0.0
  %629 = vmatprep.subr.mxu0 0.0
  %630 = vmatpush1.msra.mxu0 0.0
  %631 = vmatprep.subr.mxu0 0.0
  %632 = vmatpush1.msra.mxu0 0.0
  %633 = vmatprep.subr.mxu0 0.0
  %634 = vmatpush1.msra.mxu0 0.0
  %635 = vmatprep.subr.mxu0 0.0
  %636 = vmatpush1.msra.mxu0 0.0
  %637 = vmatprep.subr.mxu0 0.0
  %638 = vmatpush1.msra.mxu0 0.0
  %639 = vmatprep.subr.mxu0 0.0
  %640 = vmatpush1.msra.mxu0 0.0
  %641 = vmatprep.subr.mxu0 0.0
  %642 = vmatpush1.msra.mxu0 0.0
  %643 = vmatprep.subr.mxu0 0.0
  %644 = vmatpush1.msra.mxu0 0.0
  %645 = vmatprep.subr.mxu0 0.0
  %646 = vmatpush1.msra.mxu0 0.0
  %647 = vmatprep.subr.mxu0 0.0
  %648 = vmatpush1.msra.mxu0 0.0
  %649 = vmatprep.subr.mxu0 0.0
  %650 = vmatpush1.msra.mxu0 0.0
  %651 = vmatprep.mubr.f32.mxu0 0.0
  %652 = vmatmul.mubr.f32.gmra.mrb[0].mxu0 %v585
  %v653 = vpop.f32.mrb[0].mxu0
  %v654 = vadd.f32 0.0, %v653
  %v655 = vpop.f32.mrb[0].mxu0
  %656 = vdwg.mxu0
  %v658 = vsel %vm336, %v581, 0
  %v661 = vsel %vm336, %v654, 0
  %663 = vmatprep.subr.mxu0 0.0
  %664 = vmatpush1.msra.mxu0 %v332
  %665 = vmatprep.subr.mxu0 0.0
  %666 = vmatpush1.msra.mxu0 0.0
  %667 = vmatprep.subr.mxu0 0.0
  %668 = vmatpush1.msra.mxu0 0.0
  %669 = vmatprep.subr.mxu0 0.0
  %670 = vmatpush1.msra.mxu0 0.0
  %671 = vmatprep.subr.mxu0 0.0
  %672 = vmatpush1.msra.mxu0 0.0
  %673 = vmatprep.subr.mxu0 0.0
  %674 = vmatpush1.msra.mxu0 0.0
  %675 = vmatprep.subr.mxu0 0.0
  %676 = vmatpush1.msra.mxu0 0.0
  %677 = vmatprep.subr.mxu0 0.0
  %678 = vmatpush1.msra.mxu0 0.0
  %679 = vmatprep.subr.mxu0 0.0
  %680 = vmatpush1.msra.mxu0 0.0
  %681 = vmatprep.subr.mxu0 0.0
  %682 = vmatpush1.msra.mxu0 0.0
  %683 = vmatprep.subr.mxu0 0.0
  %684 = vmatpush1.msra.mxu0 0.0
  %685 = vmatprep.subr.mxu0 0.0
  %686 = vmatpush1.msra.mxu0 0.0
  %687 = vmatprep.subr.mxu0 0.0
  %688 = vmatpush1.msra.mxu0 0.0
  %689 = vmatprep.subr.mxu0 0.0
  %690 = vmatpush1.msra.mxu0 0.0
  %691 = vmatprep.subr.mxu0 0.0
  %692 = vmatpush1.msra.mxu0 0.0
  %693 = vmatprep.subr.mxu0 0.0
  %694 = vmatpush1.msra.mxu0 0.0
  %695 = vmatprep.subr.mxu0 0.0
  %696 = vmatpush1.msra.mxu0 0.0
  %697 = vmatprep.subr.mxu0 0.0
  %698 = vmatpush1.msra.mxu0 0.0
  %699 = vmatprep.subr.mxu0 0.0
  %700 = vmatpush1.msra.mxu0 0.0
  %701 = vmatprep.subr.mxu0 0.0
  %702 = vmatpush1.msra.mxu0 0.0
  %703 = vmatprep.subr.mxu0 0.0
  %704 = vmatpush1.msra.mxu0 0.0
  %705 = vmatprep.subr.mxu0 0.0
  %706 = vmatpush1.msra.mxu0 0.0
  %707 = vmatprep.subr.mxu0 0.0
  %708 = vmatpush1.msra.mxu0 0.0
  %709 = vmatprep.subr.mxu0 0.0
  %710 = vmatpush1.msra.mxu0 0.0
  %711 = vmatprep.subr.mxu0 0.0
  %712 = vmatpush1.msra.mxu0 0.0
  %713 = vmatprep.subr.mxu0 0.0
  %714 = vmatpush1.msra.mxu0 0.0
  %715 = vmatprep.subr.mxu0 0.0
  %716 = vmatpush1.msra.mxu0 0.0
  %717 = vmatprep.subr.mxu0 0.0
  %718 = vmatpush1.msra.mxu0 0.0
  %719 = vmatprep.subr.mxu0 0.0
  %720 = vmatpush1.msra.mxu0 0.0
  %721 = vmatprep.subr.mxu0 0.0
  %722 = vmatpush1.msra.mxu0 0.0
  %723 = vmatprep.subr.mxu0 0.0
  %724 = vmatpush1.msra.mxu0 0.0
  %725 = vmatprep.subr.mxu0 0.0
  %726 = vmatpush1.msra.mxu0 0.0
  %727 = vmatprep.mubr.f32.mxu0 0.0
  %728 = vmatmul.mubr.f32.gmra.mrb[0].mxu0 %v658
  %v729 = vpop.f32.mrb[0].mxu0
  %v730 = vadd.f32 0.0, %v729
  %v731 = vpop.f32.mrb[0].mxu0
  %732 = vmatprep.mubr.f32.mxu0 0.0
  %733 = vmatmul.mubr.f32.gmra.mrb[0].mxu0 %v661
  %v734 = vpop.f32.mrb[0].mxu0
  %v735 = vadd.f32 0.0, %v734
  %v736 = vpop.f32.mrb[0].mxu0
  %737 = vdwg.mxu0
  %v738 = vlaneseq
  %v739 = vshrl.u32 %v738, 7
  %v740 = vsub.s32 3, %v739
  %v741 = vrot.slane %v32, %v740
  %v742 = vadd.f32 %v741, %v730
  %v743 = vadd.f32 %v741, %v735
  %744 = vrot.lane.b32.xlu0 %v318, 120
  %v745 = vpop.permute.xlu0 %744
  %746 = vrot.lane.b32.xlu0 %v324, 120
  %v747 = vpop.permute.xlu0 %746
  %v748 = vsel %vm336, %v745, 0
  %v750 = vsel %vm336, %v747, 0
  %752 = vmatprep.subr.mxu0 0.0
  %753 = vmatpush1.xpose.msra.mxu0 %v750
  %754 = vmatprep.subr.mxu0 0.0
  %755 = vmatpush1.xpose.msra.mxu0 0.0
  %756 = vmatprep.subr.mxu0 0.0
  %757 = vmatpush1.xpose.msra.mxu0 0.0
  %758 = vmatprep.subr.mxu0 0.0
  %759 = vmatpush1.xpose.msra.mxu0 0.0
  %760 = vmatprep.subr.mxu0 0.0
  %761 = vmatpush1.xpose.msra.mxu0 0.0
  %762 = vmatprep.subr.mxu0 0.0
  %763 = vmatpush1.xpose.msra.mxu0 0.0
  %764 = vmatprep.subr.mxu0 0.0
  %765 = vmatpush1.xpose.msra.mxu0 0.0
  %766 = vmatprep.subr.mxu0 0.0
  %767 = vmatpush1.xpose.msra.mxu0 0.0
  %768 = vmatprep.subr.mxu0 0.0
  %769 = vmatpush1.xpose.msra.mxu0 0.0
  %770 = vmatprep.subr.mxu0 0.0
  %771 = vmatpush1.xpose.msra.mxu0 0.0
  %772 = vmatprep.subr.mxu0 0.0
  %773 = vmatpush1.xpose.msra.mxu0 0.0
  %774 = vmatprep.subr.mxu0 0.0
  %775 = vmatpush1.xpose.msra.mxu0 0.0
  %776 = vmatprep.subr.mxu0 0.0
  %777 = vmatpush1.xpose.msra.mxu0 0.0
  %778 = vmatprep.subr.mxu0 0.0
  %779 = vmatpush1.xpose.msra.mxu0 0.0
  %780 = vmatprep.subr.mxu0 0.0
  %781 = vmatpush1.xpose.msra.mxu0 0.0
  %782 = vmatprep.subr.mxu0 0.0
  %783 = vmatpush1.xpose.msra.mxu0 0.0
  %784 = vmatprep.subr.mxu0 0.0
  %785 = vmatpush1.xpose.msra.mxu0 0.0
  %786 = vmatprep.subr.mxu0 0.0
  %787 = vmatpush1.xpose.msra.mxu0 0.0
  %788 = vmatprep.subr.mxu0 0.0
  %789 = vmatpush1.xpose.msra.mxu0 0.0
  %790 = vmatprep.subr.mxu0 0.0
  %791 = vmatpush1.xpose.msra.mxu0 0.0
  %792 = vmatprep.subr.mxu0 0.0
  %793 = vmatpush1.xpose.msra.mxu0 0.0
  %794 = vmatprep.subr.mxu0 0.0
  %795 = vmatpush1.xpose.msra.mxu0 0.0
  %796 = vmatprep.subr.mxu0 0.0
  %797 = vmatpush1.xpose.msra.mxu0 0.0
  %798 = vmatprep.subr.mxu0 0.0
  %799 = vmatpush1.xpose.msra.mxu0 0.0
  %800 = vmatprep.subr.mxu0 0.0
  %801 = vmatpush1.xpose.msra.mxu0 0.0
  %802 = vmatprep.subr.mxu0 0.0
  %803 = vmatpush1.xpose.msra.mxu0 0.0
  %804 = vmatprep.subr.mxu0 0.0
  %805 = vmatpush1.xpose.msra.mxu0 0.0
  %806 = vmatprep.subr.mxu0 0.0
  %807 = vmatpush1.xpose.msra.mxu0 0.0
  %808 = vmatprep.subr.mxu0 0.0
  %809 = vmatpush1.xpose.msra.mxu0 0.0
  %810 = vmatprep.subr.mxu0 0.0
  %811 = vmatpush1.xpose.msra.mxu0 0.0
  %812 = vmatprep.subr.mxu0 0.0
  %813 = vmatpush1.xpose.msra.mxu0 0.0
  %814 = vmatprep.subr.mxu0 0.0
  %815 = vmatpush1.xpose.msra.mxu0 0.0
  %816 = vmatprep.mubr.f32.mxu0 0.0
  %817 = vmatmul.mubr.f32.gmra.mrb[0].mxu0 %v748
  %v818 = vpop.f32.mrb[0].mxu0
  %v819 = vadd.f32 0.0, %v818
  %v820 = vpop.f32.mrb[0].mxu0
  %821 = vdwg.mxu0
  %822 = vrot.lane.b32.xlu0 %v319, 120
  %v823 = vpop.permute.xlu0 %822
  %824 = vrot.lane.b32.xlu0 %v325, 120
  %v825 = vpop.permute.xlu0 %824
  %v826 = vsel %vm336, %v823, 0
  %v828 = vsel %vm336, %v825, 0
  %830 = vmatprep.subr.mxu0 0.0
  %831 = vmatpush1.xpose.msra.mxu0 %v828
  %832 = vmatprep.subr.mxu0 0.0
  %833 = vmatpush1.xpose.msra.mxu0 0.0
  %834 = vmatprep.subr.mxu0 0.0
  %835 = vmatpush1.xpose.msra.mxu0 0.0
  %836 = vmatprep.subr.mxu0 0.0
  %837 = vmatpush1.xpose.msra.mxu0 0.0
  %838 = vmatprep.subr.mxu0 0.0
  %839 = vmatpush1.xpose.msra.mxu0 0.0
  %840 = vmatprep.subr.mxu0 0.0
  %841 = vmatpush1.xpose.msra.mxu0 0.0
  %842 = vmatprep.subr.mxu0 0.0
  %843 = vmatpush1.xpose.msra.mxu0 0.0
  %844 = vmatprep.subr.mxu0 0.0
  %845 = vmatpush1.xpose.msra.mxu0 0.0
  %846 = vmatprep.subr.mxu0 0.0
  %847 = vmatpush1.xpose.msra.mxu0 0.0
  %848 = vmatprep.subr.mxu0 0.0
  %849 = vmatpush1.xpose.msra.mxu0 0.0
  %850 = vmatprep.subr.mxu0 0.0
  %851 = vmatpush1.xpose.msra.mxu0 0.0
  %852 = vmatprep.subr.mxu0 0.0
  %853 = vmatpush1.xpose.msra.mxu0 0.0
  %854 = vmatprep.subr.mxu0 0.0
  %855 = vmatpush1.xpose.msra.mxu0 0.0
  %856 = vmatprep.subr.mxu0 0.0
  %857 = vmatpush1.xpose.msra.mxu0 0.0
  %858 = vmatprep.subr.mxu0 0.0
  %859 = vmatpush1.xpose.msra.mxu0 0.0
  %860 = vmatprep.subr.mxu0 0.0
  %861 = vmatpush1.xpose.msra.mxu0 0.0
  %862 = vmatprep.subr.mxu0 0.0
  %863 = vmatpush1.xpose.msra.mxu0 0.0
  %864 = vmatprep.subr.mxu0 0.0
  %865 = vmatpush1.xpose.msra.mxu0 0.0
  %866 = vmatprep.subr.mxu0 0.0
  %867 = vmatpush1.xpose.msra.mxu0 0.0
  %868 = vmatprep.subr.mxu0 0.0
  %869 = vmatpush1.xpose.msra.mxu0 0.0
  %870 = vmatprep.subr.mxu0 0.0
  %871 = vmatpush1.xpose.msra.mxu0 0.0
  %872 = vmatprep.subr.mxu0 0.0
  %873 = vmatpush1.xpose.msra.mxu0 0.0
  %874 = vmatprep.subr.mxu0 0.0
  %875 = vmatpush1.xpose.msra.mxu0 0.0
  %876 = vmatprep.subr.mxu0 0.0
  %877 = vmatpush1.xpose.msra.mxu0 0.0
  %878 = vmatprep.subr.mxu0 0.0
  %879 = vmatpush1.xpose.msra.mxu0 0.0
  %880 = vmatprep.subr.mxu0 0.0
  %881 = vmatpush1.xpose.msra.mxu0 0.0
  %882 = vmatprep.subr.mxu0 0.0
  %883 = vmatpush1.xpose.msra.mxu0 0.0
  %884 = vmatprep.subr.mxu0 0.0
  %885 = vmatpush1.xpose.msra.mxu0 0.0
  %886 = vmatprep.subr.mxu0 0.0
  %887 = vmatpush1.xpose.msra.mxu0 0.0
  %888 = vmatprep.subr.mxu0 0.0
  %889 = vmatpush1.xpose.msra.mxu0 0.0
  %890 = vmatprep.subr.mxu0 0.0
  %891 = vmatpush1.xpose.msra.mxu0 0.0
  %892 = vmatprep.subr.mxu0 0.0
  %893 = vmatpush1.xpose.msra.mxu0 0.0
  %894 = vmatprep.mubr.f32.mxu0 0.0
  %895 = vmatmul.mubr.f32.gmra.mrb[0].mxu0 %v826
  %v896 = vpop.f32.mrb[0].mxu0
  %v897 = vadd.f32 0.0, %v896
  %v898 = vpop.f32.mrb[0].mxu0
  %899 = vdwg.mxu0
  %v900 = vsel %vm336, %v819, -inf
  %901 = vmax.xlane.f32.xlu0 %v900
  %v902 = vpop.xlane.xlu0 %901
  %v903 = vsel %vm336, %v897, -inf
  %904 = vmax.xlane.f32.xlu0 %v903
  %v905 = vpop.xlane.xlu0 %904
  %v906 = vsub.f32 %v819, %v902
  %v907 = vsub.f32 %v897, %v905
  %v908 = vmul.f32 %v906, 1.442695
  %v909 = vpow.pop %v908
  %v910 = vmul.f32 %v907, 1.442695
  %v911 = vpow.pop %v910
  %v912 = vsel %vm336, %v909, 0.0
  %913 = vadd.xlane.f32.xlu0 %v912
  %v914 = vpop.xlane.xlu0 %913
  %v915 = vsel %vm336, %v911, 0.0
  %916 = vadd.xlane.f32.xlu0 %v915
  %v917 = vpop.xlane.xlu0 %916
  %v918 = vrcp.pop %v914
  %v919 = vrcp.pop %v917
  %v920 = vmul.f32 %v909, %v918
  %v921 = vmul.f32 %v911, %v919
  %923 = vrot.lane.b32.xlu0 %v330, 120
  %v924 = vpop.permute.xlu0 %923
  %v927 = vsel %vm336, %v920, 0
  %929 = vmatprep.subr.mxu0 0.0
  %930 = vmatpush1.msra.mxu0 %v924
  %931 = vmatprep.subr.mxu0 0.0
  %932 = vmatpush1.msra.mxu0 0.0
  %933 = vmatprep.subr.mxu0 0.0
  %934 = vmatpush1.msra.mxu0 0.0
  %935 = vmatprep.subr.mxu0 0.0
  %936 = vmatpush1.msra.mxu0 0.0
  %937 = vmatprep.subr.mxu0 0.0
  %938 = vmatpush1.msra.mxu0 0.0
  %939 = vmatprep.subr.mxu0 0.0
  %940 = vmatpush1.msra.mxu0 0.0
  %941 = vmatprep.subr.mxu0 0.0
  %942 = vmatpush1.msra.mxu0 0.0
  %943 = vmatprep.subr.mxu0 0.0
  %944 = vmatpush1.msra.mxu0 0.0
  %945 = vmatprep.subr.mxu0 0.0
  %946 = vmatpush1.msra.mxu0 0.0
  %947 = vmatprep.subr.mxu0 0.0
  %948 = vmatpush1.msra.mxu0 0.0
  %949 = vmatprep.subr.mxu0 0.0
  %950 = vmatpush1.msra.mxu0 0.0
  %951 = vmatprep.subr.mxu0 0.0
  %952 = vmatpush1.msra.mxu0 0.0
  %953 = vmatprep.subr.mxu0 0.0
  %954 = vmatpush1.msra.mxu0 0.0
  %955 = vmatprep.subr.mxu0 0.0
  %956 = vmatpush1.msra.mxu0 0.0
  %957 = vmatprep.subr.mxu0 0.0
  %958 = vmatpush1.msra.mxu0 0.0
  %959 = vmatprep.subr.mxu0 0.0
  %960 = vmatpush1.msra.mxu0 0.0
  %961 = vmatprep.subr.mxu0 0.0
  %962 = vmatpush1.msra.mxu0 0.0
  %963 = vmatprep.subr.mxu0 0.0
  %964 = vmatpush1.msra.mxu0 0.0
  %965 = vmatprep.subr.mxu0 0.0
  %966 = vmatpush1.msra.mxu0 0.0
  %967 = vmatprep.subr.mxu0 0.0
  %968 = vmatpush1.msra.mxu0 0.0
  %969 = vmatprep.subr.mxu0 0.0
  %970 = vmatpush1.msra.mxu0 0.0
  %971 = vmatprep.subr.mxu0 0.0
  %972 = vmatpush1.msra.mxu0 0.0
  %973 = vmatprep.subr.mxu0 0.0
  %974 = vmatpush1.msra.mxu0 0.0
  %975 = vmatprep.subr.mxu0 0.0
  %976 = vmatpush1.msra.mxu0 0.0
  %977 = vmatprep.subr.mxu0 0.0
  %978 = vmatpush1.msra.mxu0 0.0
  %979 = vmatprep.subr.mxu0 0.0
  %980 = vmatpush1.msra.mxu0 0.0
  %981 = vmatprep.subr.mxu0 0.0
  %982 = vmatpush1.msra.mxu0 0.0
  %983 = vmatprep.subr.mxu0 0.0
  %984 = vmatpush1.msra.mxu0 0.0
  %985 = vmatprep.subr.mxu0 0.0
  %986 = vmatpush1.msra.mxu0 0.0
  %987 = vmatprep.subr.mxu0 0.0
  %988 = vmatpush1.msra.mxu0 0.0
  %989 = vmatprep.subr.mxu0 0.0
  %990 = vmatpush1.msra.mxu0 0.0
  %991 = vmatprep.subr.mxu0 0.0
  %992 = vmatpush1.msra.mxu0 0.0
  %993 = vmatprep.mubr.f32.mxu0 0.0
  %994 = vmatmul.mubr.f32.gmra.mrb[0].mxu0 %v927
  %v995 = vpop.f32.mrb[0].mxu0
  %v996 = vadd.f32 0.0, %v995
  %v997 = vpop.f32.mrb[0].mxu0
  %998 = vdwg.mxu0
  %1000 = vrot.lane.b32.xlu0 %v331, 120
  %v1001 = vpop.permute.xlu0 %1000
  %v1004 = vsel %vm336, %v921, 0
  %1006 = vmatprep.subr.mxu0 0.0
  %1007 = vmatpush1.msra.mxu0 %v1001
  %1008 = vmatprep.subr.mxu0 0.0
  %1009 = vmatpush1.msra.mxu0 0.0
  %1010 = vmatprep.subr.mxu0 0.0
  %1011 = vmatpush1.msra.mxu0 0.0
  %1012 = vmatprep.subr.mxu0 0.0
  %1013 = vmatpush1.msra.mxu0 0.0
  %1014 = vmatprep.subr.mxu0 0.0
  %1015 = vmatpush1.msra.mxu0 0.0
  %1016 = vmatprep.subr.mxu0 0.0
  %1017 = vmatpush1.msra.mxu0 0.0
  %1018 = vmatprep.subr.mxu0 0.0
  %1019 = vmatpush1.msra.mxu0 0.0
  %1020 = vmatprep.subr.mxu0 0.0
  %1021 = vmatpush1.msra.mxu0 0.0
  %1022 = vmatprep.subr.mxu0 0.0
  %1023 = vmatpush1.msra.mxu0 0.0
  %1024 = vmatprep.subr.mxu0 0.0
  %1025 = vmatpush1.msra.mxu0 0.0
  %1026 = vmatprep.subr.mxu0 0.0
  %1027 = vmatpush1.msra.mxu0 0.0
  %1028 = vmatprep.subr.mxu0 0.0
  %1029 = vmatpush1.msra.mxu0 0.0
  %1030 = vmatprep.subr.mxu0 0.0
  %1031 = vmatpush1.msra.mxu0 0.0
  %1032 = vmatprep.subr.mxu0 0.0
  %1033 = vmatpush1.msra.mxu0 0.0
  %1034 = vmatprep.subr.mxu0 0.0
  %1035 = vmatpush1.msra.mxu0 0.0
  %1036 = vmatprep.subr.mxu0 0.0
  %1037 = vmatpush1.msra.mxu0 0.0
  %1038 = vmatprep.subr.mxu0 0.0
  %1039 = vmatpush1.msra.mxu0 0.0
  %1040 = vmatprep.subr.mxu0 0.0
  %1041 = vmatpush1.msra.mxu0 0.0
  %1042 = vmatprep.subr.mxu0 0.0
  %1043 = vmatpush1.msra.mxu0 0.0
  %1044 = vmatprep.subr.mxu0 0.0
  %1045 = vmatpush1.msra.mxu0 0.0
  %1046 = vmatprep.subr.mxu0 0.0
  %1047 = vmatpush1.msra.mxu0 0.0
  %1048 = vmatprep.subr.mxu0 0.0
  %1049 = vmatpush1.msra.mxu0 0.0
  %1050 = vmatprep.subr.mxu0 0.0
  %1051 = vmatpush1.msra.mxu0 0.0
  %1052 = vmatprep.subr.mxu0 0.0
  %1053 = vmatpush1.msra.mxu0 0.0
  %1054 = vmatprep.subr.mxu0 0.0
  %1055 = vmatpush1.msra.mxu0 0.0
  %1056 = vmatprep.subr.mxu0 0.0
  %1057 = vmatpush1.msra.mxu0 0.0
  %1058 = vmatprep.subr.mxu0 0.0
  %1059 = vmatpush1.msra.mxu0 0.0
  %1060 = vmatprep.subr.mxu0 0.0
  %1061 = vmatpush1.msra.mxu0 0.0
  %1062 = vmatprep.subr.mxu0 0.0
  %1063 = vmatpush1.msra.mxu0 0.0
  %1064 = vmatprep.subr.mxu0 0.0
  %1065 = vmatpush1.msra.mxu0 0.0
  %1066 = vmatprep.subr.mxu0 0.0
  %1067 = vmatpush1.msra.mxu0 0.0
  %1068 = vmatprep.subr.mxu0 0.0
  %1069 = vmatpush1.msra.mxu0 0.0
  %1070 = vmatprep.mubr.f32.mxu0 0.0
  %1071 = vmatmul.mubr.f32.gmra.mrb[0].mxu0 %v1004
  %v1072 = vpop.f32.mrb[0].mxu0
  %v1073 = vadd.f32 0.0, %v1072
  %v1074 = vpop.f32.mrb[0].mxu0
  %1075 = vdwg.mxu0
  %v1077 = vsel %vm336, %v996, 0
  %v1080 = vsel %vm336, %v1073, 0
  %1082 = vmatprep.subr.mxu0 0.0
  %1083 = vmatpush1.msra.mxu0 %v333
  %1084 = vmatprep.subr.mxu0 0.0
  %1085 = vmatpush1.msra.mxu0 0.0
  %1086 = vmatprep.subr.mxu0 0.0
  %1087 = vmatpush1.msra.mxu0 0.0
  %1088 = vmatprep.subr.mxu0 0.0
  %1089 = vmatpush1.msra.mxu0 0.0
  %1090 = vmatprep.subr.mxu0 0.0
  %1091 = vmatpush1.msra.mxu0 0.0
  %1092 = vmatprep.subr.mxu0 0.0
  %1093 = vmatpush1.msra.mxu0 0.0
  %1094 = vmatprep.subr.mxu0 0.0
  %1095 = vmatpush1.msra.mxu0 0.0
  %1096 = vmatprep.subr.mxu0 0.0
  %1097 = vmatpush1.msra.mxu0 0.0
  %1098 = vmatprep.subr.mxu0 0.0
  %1099 = vmatpush1.msra.mxu0 0.0
  %1100 = vmatprep.subr.mxu0 0.0
  %1101 = vmatpush1.msra.mxu0 0.0
  %1102 = vmatprep.subr.mxu0 0.0
  %1103 = vmatpush1.msra.mxu0 0.0
  %1104 = vmatprep.subr.mxu0 0.0
  %1105 = vmatpush1.msra.mxu0 0.0
  %1106 = vmatprep.subr.mxu0 0.0
  %1107 = vmatpush1.msra.mxu0 0.0
  %1108 = vmatprep.subr.mxu0 0.0
  %1109 = vmatpush1.msra.mxu0 0.0
  %1110 = vmatprep.subr.mxu0 0.0
  %1111 = vmatpush1.msra.mxu0 0.0
  %1112 = vmatprep.subr.mxu0 0.0
  %1113 = vmatpush1.msra.mxu0 0.0
  %1114 = vmatprep.subr.mxu0 0.0
  %1115 = vmatpush1.msra.mxu0 0.0
  %1116 = vmatprep.subr.mxu0 0.0
  %1117 = vmatpush1.msra.mxu0 0.0
  %1118 = vmatprep.subr.mxu0 0.0
  %1119 = vmatpush1.msra.mxu0 0.0
  %1120 = vmatprep.subr.mxu0 0.0
  %1121 = vmatpush1.msra.mxu0 0.0
  %1122 = vmatprep.subr.mxu0 0.0
  %1123 = vmatpush1.msra.mxu0 0.0
  %1124 = vmatprep.subr.mxu0 0.0
  %1125 = vmatpush1.msra.mxu0 0.0
  %1126 = vmatprep.subr.mxu0 0.0
  %1127 = vmatpush1.msra.mxu0 0.0
  %1128 = vmatprep.subr.mxu0 0.0
  %1129 = vmatpush1.msra.mxu0 0.0
  %1130 = vmatprep.subr.mxu0 0.0
  %1131 = vmatpush1.msra.mxu0 0.0
  %1132 = vmatprep.subr.mxu0 0.0
  %1133 = vmatpush1.msra.mxu0 0.0
  %1134 = vmatprep.subr.mxu0 0.0
  %1135 = vmatpush1.msra.mxu0 0.0
  %1136 = vmatprep.subr.mxu0 0.0
  %1137 = vmatpush1.msra.mxu0 0.0
  %1138 = vmatprep.subr.mxu0 0.0
  %1139 = vmatpush1.msra.mxu0 0.0
  %1140 = vmatprep.subr.mxu0 0.0
  %1141 = vmatpush1.msra.mxu0 0.0
  %1142 = vmatprep.subr.mxu0 0.0
  %1143 = vmatpush1.msra.mxu0 0.0
  %1144 = vmatprep.subr.mxu0 0.0
  %1145 = vmatpush1.msra.mxu0 0.0
  %1146 = vmatprep.mubr.f32.mxu0 0.0
  %1147 = vmatmul.mubr.f32.gmra.mrb[0].mxu0 %v1077
  %v1148 = vpop.f32.mrb[0].mxu0
  %v1149 = vadd.f32 0.0, %v1148
  %v1150 = vpop.f32.mrb[0].mxu0
  %1151 = vmatprep.mubr.f32.mxu0 0.0
  %1152 = vmatmul.mubr.f32.gmra.mrb[0].mxu0 %v1080
  %v1153 = vpop.f32.mrb[0].mxu0
  %v1154 = vadd.f32 0.0, %v1153
  %v1155 = vpop.f32.mrb[0].mxu0
  %1156 = vdwg.mxu0
  %v1157 = vadd.f32 %v742, %v1149
  %v1158 = vadd.f32 %v743, %v1154
  %1159 = vrot.lane.b32.xlu0 %v318, 112
  %v1160 = vpop.permute.xlu0 %1159
  %1161 = vrot.lane.b32.xlu0 %v324, 112
  %v1162 = vpop.permute.xlu0 %1161
  %v1163 = vsel %vm336, %v1160, 0
  %v1165 = vsel %vm336, %v1162, 0
  %1167 = vmatprep.subr.mxu0 0.0
  %1168 = vmatpush1.xpose.msra.mxu0 %v1165
  %1169 = vmatprep.subr.mxu0 0.0
  %1170 = vmatpush1.xpose.msra.mxu0 0.0
  %1171 = vmatprep.subr.mxu0 0.0
  %1172 = vmatpush1.xpose.msra.mxu0 0.0
  %1173 = vmatprep.subr.mxu0 0.0
  %1174 = vmatpush1.xpose.msra.mxu0 0.0
  %1175 = vmatprep.subr.mxu0 0.0
  %1176 = vmatpush1.xpose.msra.mxu0 0.0
  %1177 = vmatprep.subr.mxu0 0.0
  %1178 = vmatpush1.xpose.msra.mxu0 0.0
  %1179 = vmatprep.subr.mxu0 0.0
  %1180 = vmatpush1.xpose.msra.mxu0 0.0
  %1181 = vmatprep.subr.mxu0 0.0
  %1182 = vmatpush1.xpose.msra.mxu0 0.0
  %1183 = vmatprep.subr.mxu0 0.0
  %1184 = vmatpush1.xpose.msra.mxu0 0.0
  %1185 = vmatprep.subr.mxu0 0.0
  %1186 = vmatpush1.xpose.msra.mxu0 0.0
  %1187 = vmatprep.subr.mxu0 0.0
  %1188 = vmatpush1.xpose.msra.mxu0 0.0
  %1189 = vmatprep.subr.mxu0 0.0
  %1190 = vmatpush1.xpose.msra.mxu0 0.0
  %1191 = vmatprep.subr.mxu0 0.0
  %1192 = vmatpush1.xpose.msra.mxu0 0.0
  %1193 = vmatprep.subr.mxu0 0.0
  %1194 = vmatpush1.xpose.msra.mxu0 0.0
  %1195 = vmatprep.subr.mxu0 0.0
  %1196 = vmatpush1.xpose.msra.mxu0 0.0
  %1197 = vmatprep.subr.mxu0 0.0
  %1198 = vmatpush1.xpose.msra.mxu0 0.0
  %1199 = vmatprep.subr.mxu0 0.0
  %1200 = vmatpush1.xpose.msra.mxu0 0.0
  %1201 = vmatprep.subr.mxu0 0.0
  %1202 = vmatpush1.xpose.msra.mxu0 0.0
  %1203 = vmatprep.subr.mxu0 0.0
  %1204 = vmatpush1.xpose.msra.mxu0 0.0
  %1205 = vmatprep.subr.mxu0 0.0
  %1206 = vmatpush1.xpose.msra.mxu0 0.0
  %1207 = vmatprep.subr.mxu0 0.0
  %1208 = vmatpush1.xpose.msra.mxu0 0.0
  %1209 = vmatprep.subr.mxu0 0.0
  %1210 = vmatpush1.xpose.msra.mxu0 0.0
  %1211 = vmatprep.subr.mxu0 0.0
  %1212 = vmatpush1.xpose.msra.mxu0 0.0
  %1213 = vmatprep.subr.mxu0 0.0
  %1214 = vmatpush1.xpose.msra.mxu0 0.0
  %1215 = vmatprep.subr.mxu0 0.0
  %1216 = vmatpush1.xpose.msra.mxu0 0.0
  %1217 = vmatprep.subr.mxu0 0.0
  %1218 = vmatpush1.xpose.msra.mxu0 0.0
  %1219 = vmatprep.subr.mxu0 0.0
  %1220 = vmatpush1.xpose.msra.mxu0 0.0
  %1221 = vmatprep.subr.mxu0 0.0
  %1222 = vmatpush1.xpose.msra.mxu0 0.0
  %1223 = vmatprep.subr.mxu0 0.0
  %1224 = vmatpush1.xpose.msra.mxu0 0.0
  %1225 = vmatprep.subr.mxu0 0.0
  %1226 = vmatpush1.xpose.msra.mxu0 0.0
  %1227 = vmatprep.subr.mxu0 0.0
  %1228 = vmatpush1.xpose.msra.mxu0 0.0
  %1229 = vmatprep.subr.mxu0 0.0
  %1230 = vmatpush1.xpose.msra.mxu0 0.0
  %1231 = vmatprep.mubr.f32.mxu0 0.0
  %1232 = vmatmul.mubr.f32.gmra.mrb[0].mxu0 %v1163
  %v1233 = vpop.f32.mrb[0].mxu0
  %v1234 = vadd.f32 0.0, %v1233
  %v1235 = vpop.f32.mrb[0].mxu0
  %1236 = vdwg.mxu0
  %1237 = vrot.lane.b32.xlu0 %v319, 112
  %v1238 = vpop.permute.xlu0 %1237
  %1239 = vrot.lane.b32.xlu0 %v325, 112
  %v1240 = vpop.permute.xlu0 %1239
  %v1241 = vsel %vm336, %v1238, 0
  %v1243 = vsel %vm336, %v1240, 0
  %1245 = vmatprep.subr.mxu0 0.0
  %1246 = vmatpush1.xpose.msra.mxu0 %v1243
  %1247 = vmatprep.subr.mxu0 0.0
  %1248 = vmatpush1.xpose.msra.mxu0 0.0
  %1249 = vmatprep.subr.mxu0 0.0
  %1250 = vmatpush1.xpose.msra.mxu0 0.0
  %1251 = vmatprep.subr.mxu0 0.0
  %1252 = vmatpush1.xpose.msra.mxu0 0.0
  %1253 = vmatprep.subr.mxu0 0.0
  %1254 = vmatpush1.xpose.msra.mxu0 0.0
  %1255 = vmatprep.subr.mxu0 0.0
  %1256 = vmatpush1.xpose.msra.mxu0 0.0
  %1257 = vmatprep.subr.mxu0 0.0
  %1258 = vmatpush1.xpose.msra.mxu0 0.0
  %1259 = vmatprep.subr.mxu0 0.0
  %1260 = vmatpush1.xpose.msra.mxu0 0.0
  %1261 = vmatprep.subr.mxu0 0.0
  %1262 = vmatpush1.xpose.msra.mxu0 0.0
  %1263 = vmatprep.subr.mxu0 0.0
  %1264 = vmatpush1.xpose.msra.mxu0 0.0
  %1265 = vmatprep.subr.mxu0 0.0
  %1266 = vmatpush1.xpose.msra.mxu0 0.0
  %1267 = vmatprep.subr.mxu0 0.0
  %1268 = vmatpush1.xpose.msra.mxu0 0.0
  %1269 = vmatprep.subr.mxu0 0.0
  %1270 = vmatpush1.xpose.msra.mxu0 0.0
  %1271 = vmatprep.subr.mxu0 0.0
  %1272 = vmatpush1.xpose.msra.mxu0 0.0
  %1273 = vmatprep.subr.mxu0 0.0
  %1274 = vmatpush1.xpose.msra.mxu0 0.0
  %1275 = vmatprep.subr.mxu0 0.0
  %1276 = vmatpush1.xpose.msra.mxu0 0.0
  %1277 = vmatprep.subr.mxu0 0.0
  %1278 = vmatpush1.xpose.msra.mxu0 0.0
  %1279 = vmatprep.subr.mxu0 0.0
  %1280 = vmatpush1.xpose.msra.mxu0 0.0
  %1281 = vmatprep.subr.mxu0 0.0
  %1282 = vmatpush1.xpose.msra.mxu0 0.0
  %1283 = vmatprep.subr.mxu0 0.0
  %1284 = vmatpush1.xpose.msra.mxu0 0.0
  %1285 = vmatprep.subr.mxu0 0.0
  %1286 = vmatpush1.xpose.msra.mxu0 0.0
  %1287 = vmatprep.subr.mxu0 0.0
  %1288 = vmatpush1.xpose.msra.mxu0 0.0
  %1289 = vmatprep.subr.mxu0 0.0
  %1290 = vmatpush1.xpose.msra.mxu0 0.0
  %1291 = vmatprep.subr.mxu0 0.0
  %1292 = vmatpush1.xpose.msra.mxu0 0.0
  %1293 = vmatprep.subr.mxu0 0.0
  %1294 = vmatpush1.xpose.msra.mxu0 0.0
  %1295 = vmatprep.subr.mxu0 0.0
  %1296 = vmatpush1.xpose.msra.mxu0 0.0
  %1297 = vmatprep.subr.mxu0 0.0
  %1298 = vmatpush1.xpose.msra.mxu0 0.0
  %1299 = vmatprep.subr.mxu0 0.0
  %1300 = vmatpush1.xpose.msra.mxu0 0.0
  %1301 = vmatprep.subr.mxu0 0.0
  %1302 = vmatpush1.xpose.msra.mxu0 0.0
  %1303 = vmatprep.subr.mxu0 0.0
  %1304 = vmatpush1.xpose.msra.mxu0 0.0
  %1305 = vmatprep.subr.mxu0 0.0
  %1306 = vmatpush1.xpose.msra.mxu0 0.0
  %1307 = vmatprep.subr.mxu0 0.0
  %1308 = vmatpush1.xpose.msra.mxu0 0.0
  %1309 = vmatprep.mubr.f32.mxu0 0.0
  %1310 = vmatmul.mubr.f32.gmra.mrb[0].mxu0 %v1241
  %v1311 = vpop.f32.mrb[0].mxu0
  %v1312 = vadd.f32 0.0, %v1311
  %v1313 = vpop.f32.mrb[0].mxu0
  %1314 = vdwg.mxu0
  %v1315 = vsel %vm336, %v1234, -inf
  %1316 = vmax.xlane.f32.xlu0 %v1315
  %v1317 = vpop.xlane.xlu0 %1316
  %v1318 = vsel %vm336, %v1312, -inf
  %1319 = vmax.xlane.f32.xlu0 %v1318
  %v1320 = vpop.xlane.xlu0 %1319
  %v1321 = vsub.f32 %v1234, %v1317
  %v1322 = vsub.f32 %v1312, %v1320
  %v1323 = vmul.f32 %v1321, 1.442695
  %v1324 = vpow.pop %v1323
  %v1325 = vmul.f32 %v1322, 1.442695
  %v1326 = vpow.pop %v1325
  %v1327 = vsel %vm336, %v1324, 0.0
  %1328 = vadd.xlane.f32.xlu0 %v1327
  %v1329 = vpop.xlane.xlu0 %1328
  %v1330 = vsel %vm336, %v1326, 0.0
  %1331 = vadd.xlane.f32.xlu0 %v1330
  %v1332 = vpop.xlane.xlu0 %1331
  %v1333 = vrcp.pop %v1329
  %v1334 = vrcp.pop %v1332
  %v1335 = vmul.f32 %v1324, %v1333
  %v1336 = vmul.f32 %v1326, %v1334
  %1337 = vrot.lane.b32.xlu0 %v330, 112
  %v1338 = vpop.permute.xlu0 %1337
  %v1341 = vsel %vm336, %v1335, 0
  %1343 = vmatprep.subr.mxu0 0.0
  %1344 = vmatpush1.msra.mxu0 %v1338
  %1345 = vmatprep.subr.mxu0 0.0
  %1346 = vmatpush1.msra.mxu0 0.0
  %1347 = vmatprep.subr.mxu0 0.0
  %1348 = vmatpush1.msra.mxu0 0.0
  %1349 = vmatprep.subr.mxu0 0.0
  %1350 = vmatpush1.msra.mxu0 0.0
  %1351 = vmatprep.subr.mxu0 0.0
  %1352 = vmatpush1.msra.mxu0 0.0
  %1353 = vmatprep.subr.mxu0 0.0
  %1354 = vmatpush1.msra.mxu0 0.0
  %1355 = vmatprep.subr.mxu0 0.0
  %1356 = vmatpush1.msra.mxu0 0.0
  %1357 = vmatprep.subr.mxu0 0.0
  %1358 = vmatpush1.msra.mxu0 0.0
  %1359 = vmatprep.subr.mxu0 0.0
  %1360 = vmatpush1.msra.mxu0 0.0
  %1361 = vmatprep.subr.mxu0 0.0
  %1362 = vmatpush1.msra.mxu0 0.0
  %1363 = vmatprep.subr.mxu0 0.0
  %1364 = vmatpush1.msra.mxu0 0.0
  %1365 = vmatprep.subr.mxu0 0.0
  %1366 = vmatpush1.msra.mxu0 0.0
  %1367 = vmatprep.subr.mxu0 0.0
  %1368 = vmatpush1.msra.mxu0 0.0
  %1369 = vmatprep.subr.mxu0 0.0
  %1370 = vmatpush1.msra.mxu0 0.0
  %1371 = vmatprep.subr.mxu0 0.0
  %1372 = vmatpush1.msra.mxu0 0.0
  %1373 = vmatprep.subr.mxu0 0.0
  %1374 = vmatpush1.msra.mxu0 0.0
  %1375 = vmatprep.subr.mxu0 0.0
  %1376 = vmatpush1.msra.mxu0 0.0
  %1377 = vmatprep.subr.mxu0 0.0
  %1378 = vmatpush1.msra.mxu0 0.0
  %1379 = vmatprep.subr.mxu0 0.0
  %1380 = vmatpush1.msra.mxu0 0.0
  %1381 = vmatprep.subr.mxu0 0.0
  %1382 = vmatpush1.msra.mxu0 0.0
  %1383 = vmatprep.subr.mxu0 0.0
  %1384 = vmatpush1.msra.mxu0 0.0
  %1385 = vmatprep.subr.mxu0 0.0
  %1386 = vmatpush1.msra.mxu0 0.0
  %1387 = vmatprep.subr.mxu0 0.0
  %1388 = vmatpush1.msra.mxu0 0.0
  %1389 = vmatprep.subr.mxu0 0.0
  %1390 = vmatpush1.msra.mxu0 0.0
  %1391 = vmatprep.subr.mxu0 0.0
  %1392 = vmatpush1.msra.mxu0 0.0
  %1393 = vmatprep.subr.mxu0 0.0
  %1394 = vmatpush1.msra.mxu0 0.0
  %1395 = vmatprep.subr.mxu0 0.0
  %1396 = vmatpush1.msra.mxu0 0.0
  %1397 = vmatprep.subr.mxu0 0.0
  %1398 = vmatpush1.msra.mxu0 0.0
  %1399 = vmatprep.subr.mxu0 0.0
  %1400 = vmatpush1.msra.mxu0 0.0
  %1401 = vmatprep.subr.mxu0 0.0
  %1402 = vmatpush1.msra.mxu0 0.0
  %1403 = vmatprep.subr.mxu0 0.0
  %1404 = vmatpush1.msra.mxu0 0.0
  %1405 = vmatprep.subr.mxu0 0.0
  %1406 = vmatpush1.msra.mxu0 0.0
  %1407 = vmatprep.mubr.f32.mxu0 0.0
  %1408 = vmatmul.mubr.f32.gmra.mrb[0].mxu0 %v1341
  %v1409 = vpop.f32.mrb[0].mxu0
  %v1410 = vadd.f32 0.0, %v1409
  %v1411 = vpop.f32.mrb[0].mxu0
  %1412 = vdwg.mxu0
  %1413 = vrot.lane.b32.xlu0 %v331, 112
  %v1414 = vpop.permute.xlu0 %1413
  %v1417 = vsel %vm336, %v1336, 0
  %1419 = vmatprep.subr.mxu0 0.0
  %1420 = vmatpush1.msra.mxu0 %v1414
  %1421 = vmatprep.subr.mxu0 0.0
  %1422 = vmatpush1.msra.mxu0 0.0
  %1423 = vmatprep.subr.mxu0 0.0
  %1424 = vmatpush1.msra.mxu0 0.0
  %1425 = vmatprep.subr.mxu0 0.0
  %1426 = vmatpush1.msra.mxu0 0.0
  %1427 = vmatprep.subr.mxu0 0.0
  %1428 = vmatpush1.msra.mxu0 0.0
  %1429 = vmatprep.subr.mxu0 0.0
  %1430 = vmatpush1.msra.mxu0 0.0
  %1431 = vmatprep.subr.mxu0 0.0
  %1432 = vmatpush1.msra.mxu0 0.0
  %1433 = vmatprep.subr.mxu0 0.0
  %1434 = vmatpush1.msra.mxu0 0.0
  %1435 = vmatprep.subr.mxu0 0.0
  %1436 = vmatpush1.msra.mxu0 0.0
  %1437 = vmatprep.subr.mxu0 0.0
  %1438 = vmatpush1.msra.mxu0 0.0
  %1439 = vmatprep.subr.mxu0 0.0
  %1440 = vmatpush1.msra.mxu0 0.0
  %1441 = vmatprep.subr.mxu0 0.0
  %1442 = vmatpush1.msra.mxu0 0.0
  %1443 = vmatprep.subr.mxu0 0.0
  %1444 = vmatpush1.msra.mxu0 0.0
  %1445 = vmatprep.subr.mxu0 0.0
  %1446 = vmatpush1.msra.mxu0 0.0
  %1447 = vmatprep.subr.mxu0 0.0
  %1448 = vmatpush1.msra.mxu0 0.0
  %1449 = vmatprep.subr.mxu0 0.0
  %1450 = vmatpush1.msra.mxu0 0.0
  %1451 = vmatprep.subr.mxu0 0.0
  %1452 = vmatpush1.msra.mxu0 0.0
  %1453 = vmatprep.subr.mxu0 0.0
  %1454 = vmatpush1.msra.mxu0 0.0
  %1455 = vmatprep.subr.mxu0 0.0
  %1456 = vmatpush1.msra.mxu0 0.0
  %1457 = vmatprep.subr.mxu0 0.0
  %1458 = vmatpush1.msra.mxu0 0.0
  %1459 = vmatprep.subr.mxu0 0.0
  %1460 = vmatpush1.msra.mxu0 0.0
  %1461 = vmatprep.subr.mxu0 0.0
  %1462 = vmatpush1.msra.mxu0 0.0
  %1463 = vmatprep.subr.mxu0 0.0
  %1464 = vmatpush1.msra.mxu0 0.0
  %1465 = vmatprep.subr.mxu0 0.0
  %1466 = vmatpush1.msra.mxu0 0.0
  %1467 = vmatprep.subr.mxu0 0.0
  %1468 = vmatpush1.msra.mxu0 0.0
  %1469 = vmatprep.subr.mxu0 0.0
  %1470 = vmatpush1.msra.mxu0 0.0
  %1471 = vmatprep.subr.mxu0 0.0
  %1472 = vmatpush1.msra.mxu0 0.0
  %1473 = vmatprep.subr.mxu0 0.0
  %1474 = vmatpush1.msra.mxu0 0.0
  %1475 = vmatprep.subr.mxu0 0.0
  %1476 = vmatpush1.msra.mxu0 0.0
  %1477 = vmatprep.subr.mxu0 0.0
  %1478 = vmatpush1.msra.mxu0 0.0
  %1479 = vmatprep.subr.mxu0 0.0
  %1480 = vmatpush1.msra.mxu0 0.0
  %1481 = vmatprep.subr.mxu0 0.0
  %1482 = vmatpush1.msra.mxu0 0.0
  %1483 = vmatprep.mubr.f32.mxu0 0.0
  %1484 = vmatmul.mubr.f32.gmra.mrb[0].mxu0 %v1417
  %v1485 = vpop.f32.mrb[0].mxu0
  %v1486 = vadd.f32 0.0, %v1485
  %v1487 = vpop.f32.mrb[0].mxu0
  %1488 = vdwg.mxu0
  %v1490 = vsel %vm336, %v1410, 0
  %v1493 = vsel %vm336, %v1486, 0
  %1495 = vmatprep.subr.mxu0 0.0
  %1496 = vmatpush1.msra.mxu0 %v334
  %1497 = vmatprep.subr.mxu0 0.0
  %1498 = vmatpush1.msra.mxu0 0.0
  %1499 = vmatprep.subr.mxu0 0.0
  %1500 = vmatpush1.msra.mxu0 0.0
  %1501 = vmatprep.subr.mxu0 0.0
  %1502 = vmatpush1.msra.mxu0 0.0
  %1503 = vmatprep.subr.mxu0 0.0
  %1504 = vmatpush1.msra.mxu0 0.0
  %1505 = vmatprep.subr.mxu0 0.0
  %1506 = vmatpush1.msra.mxu0 0.0
  %1507 = vmatprep.subr.mxu0 0.0
  %1508 = vmatpush1.msra.mxu0 0.0
  %1509 = vmatprep.subr.mxu0 0.0
  %1510 = vmatpush1.msra.mxu0 0.0
  %1511 = vmatprep.subr.mxu0 0.0
  %1512 = vmatpush1.msra.mxu0 0.0
  %1513 = vmatprep.subr.mxu0 0.0
  %1514 = vmatpush1.msra.mxu0 0.0
  %1515 = vmatprep.subr.mxu0 0.0
  %1516 = vmatpush1.msra.mxu0 0.0
  %1517 = vmatprep.subr.mxu0 0.0
  %1518 = vmatpush1.msra.mxu0 0.0
  %1519 = vmatprep.subr.mxu0 0.0
  %1520 = vmatpush1.msra.mxu0 0.0
  %1521 = vmatprep.subr.mxu0 0.0
  %1522 = vmatpush1.msra.mxu0 0.0
  %1523 = vmatprep.subr.mxu0 0.0
  %1524 = vmatpush1.msra.mxu0 0.0
  %1525 = vmatprep.subr.mxu0 0.0
  %1526 = vmatpush1.msra.mxu0 0.0
  %1527 = vmatprep.subr.mxu0 0.0
  %1528 = vmatpush1.msra.mxu0 0.0
  %1529 = vmatprep.subr.mxu0 0.0
  %1530 = vmatpush1.msra.mxu0 0.0
  %1531 = vmatprep.subr.mxu0 0.0
  %1532 = vmatpush1.msra.mxu0 0.0
  %1533 = vmatprep.subr.mxu0 0.0
  %1534 = vmatpush1.msra.mxu0 0.0
  %1535 = vmatprep.subr.mxu0 0.0
  %1536 = vmatpush1.msra.mxu0 0.0
  %1537 = vmatprep.subr.mxu0 0.0
  %1538 = vmatpush1.msra.mxu0 0.0
  %1539 = vmatprep.subr.mxu0 0.0
  %1540 = vmatpush1.msra.mxu0 0.0
  %1541 = vmatprep.subr.mxu0 0.0
  %1542 = vmatpush1.msra.mxu0 0.0
  %1543 = vmatprep.subr.mxu0 0.0
  %1544 = vmatpush1.msra.mxu0 0.0
  %1545 = vmatprep.subr.mxu0 0.0
  %1546 = vmatpush1.msra.mxu0 0.0
  %1547 = vmatprep.subr.mxu0 0.0
  %1548 = vmatpush1.msra.mxu0 0.0
  %1549 = vmatprep.subr.mxu0 0.0
  %1550 = vmatpush1.msra.mxu0 0.0
  %1551 = vmatprep.subr.mxu0 0.0
  %1552 = vmatpush1.msra.mxu0 0.0
  %1553 = vmatprep.subr.mxu0 0.0
  %1554 = vmatpush1.msra.mxu0 0.0
  %1555 = vmatprep.subr.mxu0 0.0
  %1556 = vmatpush1.msra.mxu0 0.0
  %1557 = vmatprep.subr.mxu0 0.0
  %1558 = vmatpush1.msra.mxu0 0.0
  %1559 = vmatprep.mubr.f32.mxu0 0.0
  %1560 = vmatmul.mubr.f32.gmra.mrb[0].mxu0 %v1490
  %v1561 = vpop.f32.mrb[0].mxu0
  %v1562 = vadd.f32 0.0, %v1561
  %v1563 = vpop.f32.mrb[0].mxu0
  %1564 = vmatprep.mubr.f32.mxu0 0.0
  %1565 = vmatmul.mubr.f32.gmra.mrb[0].mxu0 %v1493
  %v1566 = vpop.f32.mrb[0].mxu0
  %v1567 = vadd.f32 0.0, %v1566
  %v1568 = vpop.f32.mrb[0].mxu0
  %1569 = vdwg.mxu0
  %v1570 = vadd.f32 %v1157, %v1562
  %v1571 = vadd.f32 %v1158, %v1567
  %1572 = vrot.lane.b32.xlu0 %v318, 104
  %v1573 = vpop.permute.xlu0 %1572
  %1574 = vrot.lane.b32.xlu0 %v324, 104
  %v1575 = vpop.permute.xlu0 %1574
  %v1576 = vsel %vm336, %v1573, 0
  %v1578 = vsel %vm336, %v1575, 0
  %1580 = vmatprep.subr.mxu0 0.0
  %1581 = vmatpush1.xpose.msra.mxu0 %v1578
  %1582 = vmatprep.subr.mxu0 0.0
  %1583 = vmatpush1.xpose.msra.mxu0 0.0
  %1584 = vmatprep.subr.mxu0 0.0
  %1585 = vmatpush1.xpose.msra.mxu0 0.0
  %1586 = vmatprep.subr.mxu0 0.0
  %1587 = vmatpush1.xpose.msra.mxu0 0.0
  %1588 = vmatprep.subr.mxu0 0.0
  %1589 = vmatpush1.xpose.msra.mxu0 0.0
  %1590 = vmatprep.subr.mxu0 0.0
  %1591 = vmatpush1.xpose.msra.mxu0 0.0
  %1592 = vmatprep.subr.mxu0 0.0
  %1593 = vmatpush1.xpose.msra.mxu0 0.0
  %1594 = vmatprep.subr.mxu0 0.0
  %1595 = vmatpush1.xpose.msra.mxu0 0.0
  %1596 = vmatprep.subr.mxu0 0.0
  %1597 = vmatpush1.xpose.msra.mxu0 0.0
  %1598 = vmatprep.subr.mxu0 0.0
  %1599 = vmatpush1.xpose.msra.mxu0 0.0
  %1600 = vmatprep.subr.mxu0 0.0
  %1601 = vmatpush1.xpose.msra.mxu0 0.0
  %1602 = vmatprep.subr.mxu0 0.0
  %1603 = vmatpush1.xpose.msra.mxu0 0.0
  %1604 = vmatprep.subr.mxu0 0.0
  %1605 = vmatpush1.xpose.msra.mxu0 0.0
  %1606 = vmatprep.subr.mxu0 0.0
  %1607 = vmatpush1.xpose.msra.mxu0 0.0
  %1608 = vmatprep.subr.mxu0 0.0
  %1609 = vmatpush1.xpose.msra.mxu0 0.0
  %1610 = vmatprep.subr.mxu0 0.0
  %1611 = vmatpush1.xpose.msra.mxu0 0.0
  %1612 = vmatprep.subr.mxu0 0.0
  %1613 = vmatpush1.xpose.msra.mxu0 0.0
  %1614 = vmatprep.subr.mxu0 0.0
  %1615 = vmatpush1.xpose.msra.mxu0 0.0
  %1616 = vmatprep.subr.mxu0 0.0
  %1617 = vmatpush1.xpose.msra.mxu0 0.0
  %1618 = vmatprep.subr.mxu0 0.0
  %1619 = vmatpush1.xpose.msra.mxu0 0.0
  %1620 = vmatprep.subr.mxu0 0.0
  %1621 = vmatpush1.xpose.msra.mxu0 0.0
  %1622 = vmatprep.subr.mxu0 0.0
  %1623 = vmatpush1.xpose.msra.mxu0 0.0
  %1624 = vmatprep.subr.mxu0 0.0
  %1625 = vmatpush1.xpose.msra.mxu0 0.0
  %1626 = vmatprep.subr.mxu0 0.0
  %1627 = vmatpush1.xpose.msra.mxu0 0.0
  %1628 = vmatprep.subr.mxu0 0.0
  %1629 = vmatpush1.xpose.msra.mxu0 0.0
  %1630 = vmatprep.subr.mxu0 0.0
  %1631 = vmatpush1.xpose.msra.mxu0 0.0
  %1632 = vmatprep.subr.mxu0 0.0
  %1633 = vmatpush1.xpose.msra.mxu0 0.0
  %1634 = vmatprep.subr.mxu0 0.0
  %1635 = vmatpush1.xpose.msra.mxu0 0.0
  %1636 = vmatprep.subr.mxu0 0.0
  %1637 = vmatpush1.xpose.msra.mxu0 0.0
  %1638 = vmatprep.subr.mxu0 0.0
  %1639 = vmatpush1.xpose.msra.mxu0 0.0
  %1640 = vmatprep.subr.mxu0 0.0
  %1641 = vmatpush1.xpose.msra.mxu0 0.0
  %1642 = vmatprep.subr.mxu0 0.0
  %1643 = vmatpush1.xpose.msra.mxu0 0.0
  %1644 = vmatprep.mubr.f32.mxu0 0.0
  %1645 = vmatmul.mubr.f32.gmra.mrb[0].mxu0 %v1576
  %v1646 = vpop.f32.mrb[0].mxu0
  %v1647 = vadd.f32 0.0, %v1646
  %v1648 = vpop.f32.mrb[0].mxu0
  %1649 = vdwg.mxu0
  %1650 = vrot.lane.b32.xlu0 %v319, 104
  %v1651 = vpop.permute.xlu0 %1650
  %1652 = vrot.lane.b32.xlu0 %v325, 104
  %v1653 = vpop.permute.xlu0 %1652
  %v1654 = vsel %vm336, %v1651, 0
  %v1656 = vsel %vm336, %v1653, 0
  %1658 = vmatprep.subr.mxu0 0.0
  %1659 = vmatpush1.xpose.msra.mxu0 %v1656
  %1660 = vmatprep.subr.mxu0 0.0
  %1661 = vmatpush1.xpose.msra.mxu0 0.0
  %1662 = vmatprep.subr.mxu0 0.0
  %1663 = vmatpush1.xpose.msra.mxu0 0.0
  %1664 = vmatprep.subr.mxu0 0.0
  %1665 = vmatpush1.xpose.msra.mxu0 0.0
  %1666 = vmatprep.subr.mxu0 0.0
  %1667 = vmatpush1.xpose.msra.mxu0 0.0
  %1668 = vmatprep.subr.mxu0 0.0
  %1669 = vmatpush1.xpose.msra.mxu0 0.0
  %1670 = vmatprep.subr.mxu0 0.0
  %1671 = vmatpush1.xpose.msra.mxu0 0.0
  %1672 = vmatprep.subr.mxu0 0.0
  %1673 = vmatpush1.xpose.msra.mxu0 0.0
  %1674 = vmatprep.subr.mxu0 0.0
  %1675 = vmatpush1.xpose.msra.mxu0 0.0
  %1676 = vmatprep.subr.mxu0 0.0
  %1677 = vmatpush1.xpose.msra.mxu0 0.0
  %1678 = vmatprep.subr.mxu0 0.0
  %1679 = vmatpush1.xpose.msra.mxu0 0.0
  %1680 = vmatprep.subr.mxu0 0.0
  %1681 = vmatpush1.xpose.msra.mxu0 0.0
  %1682 = vmatprep.subr.mxu0 0.0
  %1683 = vmatpush1.xpose.msra.mxu0 0.0
  %1684 = vmatprep.subr.mxu0 0.0
  %1685 = vmatpush1.xpose.msra.mxu0 0.0
  %1686 = vmatprep.subr.mxu0 0.0
  %1687 = vmatpush1.xpose.msra.mxu0 0.0
  %1688 = vmatprep.subr.mxu0 0.0
  %1689 = vmatpush1.xpose.msra.mxu0 0.0
  %1690 = vmatprep.subr.mxu0 0.0
  %1691 = vmatpush1.xpose.msra.mxu0 0.0
  %1692 = vmatprep.subr.mxu0 0.0
  %1693 = vmatpush1.xpose.msra.mxu0 0.0
  %1694 = vmatprep.subr.mxu0 0.0
  %1695 = vmatpush1.xpose.msra.mxu0 0.0
  %1696 = vmatprep.subr.mxu0 0.0
  %1697 = vmatpush1.xpose.msra.mxu0 0.0
  %1698 = vmatprep.subr.mxu0 0.0
  %1699 = vmatpush1.xpose.msra.mxu0 0.0
  %1700 = vmatprep.subr.mxu0 0.0
  %1701 = vmatpush1.xpose.msra.mxu0 0.0
  %1702 = vmatprep.subr.mxu0 0.0
  %1703 = vmatpush1.xpose.msra.mxu0 0.0
  %1704 = vmatprep.subr.mxu0 0.0
  %1705 = vmatpush1.xpose.msra.mxu0 0.0
  %1706 = vmatprep.subr.mxu0 0.0
  %1707 = vmatpush1.xpose.msra.mxu0 0.0
  %1708 = vmatprep.subr.mxu0 0.0
  %1709 = vmatpush1.xpose.msra.mxu0 0.0
  %1710 = vmatprep.subr.mxu0 0.0
  %1711 = vmatpush1.xpose.msra.mxu0 0.0
  %1712 = vmatprep.subr.mxu0 0.0
  %1713 = vmatpush1.xpose.msra.mxu0 0.0
  %1714 = vmatprep.subr.mxu0 0.0
  %1715 = vmatpush1.xpose.msra.mxu0 0.0
  %1716 = vmatprep.subr.mxu0 0.0
  %1717 = vmatpush1.xpose.msra.mxu0 0.0
  %1718 = vmatprep.subr.mxu0 0.0
  %1719 = vmatpush1.xpose.msra.mxu0 0.0
  %1720 = vmatprep.subr.mxu0 0.0
  %1721 = vmatpush1.xpose.msra.mxu0 0.0
  %1722 = vmatprep.mubr.f32.mxu0 0.0
  %1723 = vmatmul.mubr.f32.gmra.mrb[0].mxu0 %v1654
  %v1724 = vpop.f32.mrb[0].mxu0
  %v1725 = vadd.f32 0.0, %v1724
  %v1726 = vpop.f32.mrb[0].mxu0
  %1727 = vdwg.mxu0
  %v1728 = vsel %vm336, %v1647, -inf
  %1729 = vmax.xlane.f32.xlu0 %v1728
  %v1730 = vpop.xlane.xlu0 %1729
  %v1731 = vsel %vm336, %v1725, -inf
  %1732 = vmax.xlane.f32.xlu0 %v1731
  %v1733 = vpop.xlane.xlu0 %1732
  %v1734 = vsub.f32 %v1647, %v1730
  %v1735 = vsub.f32 %v1725, %v1733
  %v1736 = vmul.f32 %v1734, 1.442695
  %v1737 = vpow.pop %v1736
  %v1738 = vmul.f32 %v1735, 1.442695
  %v1739 = vpow.pop %v1738
  %v1740 = vsel %vm336, %v1737, 0.0
  %1741 = vadd.xlane.f32.xlu0 %v1740
  %v1742 = vpop.xlane.xlu0 %1741
  %v1743 = vsel %vm336, %v1739, 0.0
  %1744 = vadd.xlane.f32.xlu0 %v1743
  %v1745 = vpop.xlane.xlu0 %1744
  %v1746 = vrcp.pop %v1742
  %v1747 = vrcp.pop %v1745
  %v1748 = vmul.f32 %v1737, %v1746
  %v1749 = vmul.f32 %v1739, %v1747
  %1750 = vrot.lane.b32.xlu0 %v330, 104
  %v1751 = vpop.permute.xlu0 %1750
  %v1754 = vsel %vm336, %v1748, 0
  %1756 = vmatprep.subr.mxu0 0.0
  %1757 = vmatpush1.msra.mxu0 %v1751
  %1758 = vmatprep.subr.mxu0 0.0
  %1759 = vmatpush1.msra.mxu0 0.0
  %1760 = vmatprep.subr.mxu0 0.0
  %1761 = vmatpush1.msra.mxu0 0.0
  %1762 = vmatprep.subr.mxu0 0.0
  %1763 = vmatpush1.msra.mxu0 0.0
  %1764 = vmatprep.subr.mxu0 0.0
  %1765 = vmatpush1.msra.mxu0 0.0
  %1766 = vmatprep.subr.mxu0 0.0
  %1767 = vmatpush1.msra.mxu0 0.0
  %1768 = vmatprep.subr.mxu0 0.0
  %1769 = vmatpush1.msra.mxu0 0.0
  %1770 = vmatprep.subr.mxu0 0.0
  %1771 = vmatpush1.msra.mxu0 0.0
  %1772 = vmatprep.subr.mxu0 0.0
  %1773 = vmatpush1.msra.mxu0 0.0
  %1774 = vmatprep.subr.mxu0 0.0
  %1775 = vmatpush1.msra.mxu0 0.0
  %1776 = vmatprep.subr.mxu0 0.0
  %1777 = vmatpush1.msra.mxu0 0.0
  %1778 = vmatprep.subr.mxu0 0.0
  %1779 = vmatpush1.msra.mxu0 0.0
  %1780 = vmatprep.subr.mxu0 0.0
  %1781 = vmatpush1.msra.mxu0 0.0
  %1782 = vmatprep.subr.mxu0 0.0
  %1783 = vmatpush1.msra.mxu0 0.0
  %1784 = vmatprep.subr.mxu0 0.0
  %1785 = vmatpush1.msra.mxu0 0.0
  %1786 = vmatprep.subr.mxu0 0.0
  %1787 = vmatpush1.msra.mxu0 0.0
  %1788 = vmatprep.subr.mxu0 0.0
  %1789 = vmatpush1.msra.mxu0 0.0
  %1790 = vmatprep.subr.mxu0 0.0
  %1791 = vmatpush1.msra.mxu0 0.0
  %1792 = vmatprep.subr.mxu0 0.0
  %1793 = vmatpush1.msra.mxu0 0.0
  %1794 = vmatprep.subr.mxu0 0.0
  %1795 = vmatpush1.msra.mxu0 0.0
  %1796 = vmatprep.subr.mxu0 0.0
  %1797 = vmatpush1.msra.mxu0 0.0
  %1798 = vmatprep.subr.mxu0 0.0
  %1799 = vmatpush1.msra.mxu0 0.0
  %1800 = vmatprep.subr.mxu0 0.0
  %1801 = vmatpush1.msra.mxu0 0.0
  %1802 = vmatprep.subr.mxu0 0.0
  %1803 = vmatpush1.msra.mxu0 0.0
  %1804 = vmatprep.subr.mxu0 0.0
  %1805 = vmatpush1.msra.mxu0 0.0
  %1806 = vmatprep.subr.mxu0 0.0
  %1807 = vmatpush1.msra.mxu0 0.0
  %1808 = vmatprep.subr.mxu0 0.0
  %1809 = vmatpush1.msra.mxu0 0.0
  %1810 = vmatprep.subr.mxu0 0.0
  %1811 = vmatpush1.msra.mxu0 0.0
  %1812 = vmatprep.subr.mxu0 0.0
  %1813 = vmatpush1.msra.mxu0 0.0
  %1814 = vmatprep.subr.mxu0 0.0
  %1815 = vmatpush1.msra.mxu0 0.0
  %1816 = vmatprep.subr.mxu0 0.0
  %1817 = vmatpush1.msra.mxu0 0.0
  %1818 = vmatprep.subr.mxu0 0.0
  %1819 = vmatpush1.msra.mxu0 0.0
  %1820 = vmatprep.mubr.f32.mxu0 0.0
  %1821 = vmatmul.mubr.f32.gmra.mrb[0].mxu0 %v1754
  %v1822 = vpop.f32.mrb[0].mxu0
  %v1823 = vadd.f32 0.0, %v1822
  %v1824 = vpop.f32.mrb[0].mxu0
  %1825 = vdwg.mxu0
  %1826 = vrot.lane.b32.xlu0 %v331, 104
  %v1827 = vpop.permute.xlu0 %1826
  %v1830 = vsel %vm336, %v1749, 0
  %1832 = vmatprep.subr.mxu0 0.0
  %1833 = vmatpush1.msra.mxu0 %v1827
  %1834 = vmatprep.subr.mxu0 0.0
  %1835 = vmatpush1.msra.mxu0 0.0
  %1836 = vmatprep.subr.mxu0 0.0
  %1837 = vmatpush1.msra.mxu0 0.0
  %1838 = vmatprep.subr.mxu0 0.0
  %1839 = vmatpush1.msra.mxu0 0.0
  %1840 = vmatprep.subr.mxu0 0.0
  %1841 = vmatpush1.msra.mxu0 0.0
  %1842 = vmatprep.subr.mxu0 0.0
  %1843 = vmatpush1.msra.mxu0 0.0
  %1844 = vmatprep.subr.mxu0 0.0
  %1845 = vmatpush1.msra.mxu0 0.0
  %1846 = vmatprep.subr.mxu0 0.0
  %1847 = vmatpush1.msra.mxu0 0.0
  %1848 = vmatprep.subr.mxu0 0.0
  %1849 = vmatpush1.msra.mxu0 0.0
  %1850 = vmatprep.subr.mxu0 0.0
  %1851 = vmatpush1.msra.mxu0 0.0
  %1852 = vmatprep.subr.mxu0 0.0
  %1853 = vmatpush1.msra.mxu0 0.0
  %1854 = vmatprep.subr.mxu0 0.0
  %1855 = vmatpush1.msra.mxu0 0.0
  %1856 = vmatprep.subr.mxu0 0.0
  %1857 = vmatpush1.msra.mxu0 0.0
  %1858 = vmatprep.subr.mxu0 0.0
  %1859 = vmatpush1.msra.mxu0 0.0
  %1860 = vmatprep.subr.mxu0 0.0
  %1861 = vmatpush1.msra.mxu0 0.0
  %1862 = vmatprep.subr.mxu0 0.0
  %1863 = vmatpush1.msra.mxu0 0.0
  %1864 = vmatprep.subr.mxu0 0.0
  %1865 = vmatpush1.msra.mxu0 0.0
  %1866 = vmatprep.subr.mxu0 0.0
  %1867 = vmatpush1.msra.mxu0 0.0
  %1868 = vmatprep.subr.mxu0 0.0
  %1869 = vmatpush1.msra.mxu0 0.0
  %1870 = vmatprep.subr.mxu0 0.0
  %1871 = vmatpush1.msra.mxu0 0.0
  %1872 = vmatprep.subr.mxu0 0.0
  %1873 = vmatpush1.msra.mxu0 0.0
  %1874 = vmatprep.subr.mxu0 0.0
  %1875 = vmatpush1.msra.mxu0 0.0
  %1876 = vmatprep.subr.mxu0 0.0
  %1877 = vmatpush1.msra.mxu0 0.0
  %1878 = vmatprep.subr.mxu0 0.0
  %1879 = vmatpush1.msra.mxu0 0.0
  %1880 = vmatprep.subr.mxu0 0.0
  %1881 = vmatpush1.msra.mxu0 0.0
  %1882 = vmatprep.subr.mxu0 0.0
  %1883 = vmatpush1.msra.mxu0 0.0
  %1884 = vmatprep.subr.mxu0 0.0
  %1885 = vmatpush1.msra.mxu0 0.0
  %1886 = vmatprep.subr.mxu0 0.0
  %1887 = vmatpush1.msra.mxu0 0.0
  %1888 = vmatprep.subr.mxu0 0.0
  %1889 = vmatpush1.msra.mxu0 0.0
  %1890 = vmatprep.subr.mxu0 0.0
  %1891 = vmatpush1.msra.mxu0 0.0
  %1892 = vmatprep.subr.mxu0 0.0
  %1893 = vmatpush1.msra.mxu0 0.0
  %1894 = vmatprep.subr.mxu0 0.0
  %1895 = vmatpush1.msra.mxu0 0.0
  %1896 = vmatprep.mubr.f32.mxu0 0.0
  %1897 = vmatmul.mubr.f32.gmra.mrb[0].mxu0 %v1830
  %v1898 = vpop.f32.mrb[0].mxu0
  %v1899 = vadd.f32 0.0, %v1898
  %v1900 = vpop.f32.mrb[0].mxu0
  %1901 = vdwg.mxu0
  %v1903 = vsel %vm336, %v1823, 0
  %v1906 = vsel %vm336, %v1899, 0
  %1908 = vmatprep.subr.mxu0 0.0
  %1909 = vmatpush1.msra.mxu0 %v335
  %1910 = vmatprep.subr.mxu0 0.0
  %1911 = vmatpush1.msra.mxu0 0.0
  %1912 = vmatprep.subr.mxu0 0.0
  %1913 = vmatpush1.msra.mxu0 0.0
  %1914 = vmatprep.subr.mxu0 0.0
  %1915 = vmatpush1.msra.mxu0 0.0
  %1916 = vmatprep.subr.mxu0 0.0
  %1917 = vmatpush1.msra.mxu0 0.0
  %1918 = vmatprep.subr.mxu0 0.0
  %1919 = vmatpush1.msra.mxu0 0.0
  %1920 = vmatprep.subr.mxu0 0.0
  %1921 = vmatpush1.msra.mxu0 0.0
  %1922 = vmatprep.subr.mxu0 0.0
  %1923 = vmatpush1.msra.mxu0 0.0
  %1924 = vmatprep.subr.mxu0 0.0
  %1925 = vmatpush1.msra.mxu0 0.0
  %1926 = vmatprep.subr.mxu0 0.0
  %1927 = vmatpush1.msra.mxu0 0.0
  %1928 = vmatprep.subr.mxu0 0.0
  %1929 = vmatpush1.msra.mxu0 0.0
  %1930 = vmatprep.subr.mxu0 0.0
  %1931 = vmatpush1.msra.mxu0 0.0
  %1932 = vmatprep.subr.mxu0 0.0
  %1933 = vmatpush1.msra.mxu0 0.0
  %1934 = vmatprep.subr.mxu0 0.0
  %1935 = vmatpush1.msra.mxu0 0.0
  %1936 = vmatprep.subr.mxu0 0.0
  %1937 = vmatpush1.msra.mxu0 0.0
  %1938 = vmatprep.subr.mxu0 0.0
  %1939 = vmatpush1.msra.mxu0 0.0
  %1940 = vmatprep.subr.mxu0 0.0
  %1941 = vmatpush1.msra.mxu0 0.0
  %1942 = vmatprep.subr.mxu0 0.0
  %1943 = vmatpush1.msra.mxu0 0.0
  %1944 = vmatprep.subr.mxu0 0.0
  %1945 = vmatpush1.msra.mxu0 0.0
  %1946 = vmatprep.subr.mxu0 0.0
  %1947 = vmatpush1.msra.mxu0 0.0
  %1948 = vmatprep.subr.mxu0 0.0
  %1949 = vmatpush1.msra.mxu0 0.0
  %1950 = vmatprep.subr.mxu0 0.0
  %1951 = vmatpush1.msra.mxu0 0.0
  %1952 = vmatprep.subr.mxu0 0.0
  %1953 = vmatpush1.msra.mxu0 0.0
  %1954 = vmatprep.subr.mxu0 0.0
  %1955 = vmatpush1.msra.mxu0 0.0
  %1956 = vmatprep.subr.mxu0 0.0
  %1957 = vmatpush1.msra.mxu0 0.0
  %1958 = vmatprep.subr.mxu0 0.0
  %1959 = vmatpush1.msra.mxu0 0.0
  %1960 = vmatprep.subr.mxu0 0.0
  %1961 = vmatpush1.msra.mxu0 0.0
  %1962 = vmatprep.subr.mxu0 0.0
  %1963 = vmatpush1.msra.mxu0 0.0
  %1964 = vmatprep.subr.mxu0 0.0
  %1965 = vmatpush1.msra.mxu0 0.0
  %1966 = vmatprep.subr.mxu0 0.0
  %1967 = vmatpush1.msra.mxu0 0.0
  %1968 = vmatprep.subr.mxu0 0.0
  %1969 = vmatpush1.msra.mxu0 0.0
  %1970 = vmatprep.subr.mxu0 0.0
  %1971 = vmatpush1.msra.mxu0 0.0
  %1972 = vmatprep.mubr.f32.mxu0 0.0
  %1973 = vmatmul.mubr.f32.gmra.mrb[0].mxu0 %v1903
  %v1974 = vpop.f32.mrb[0].mxu0
  %v1975 = vadd.f32 0.0, %v1974
  %v1976 = vpop.f32.mrb[0].mxu0
  %1977 = vmatprep.mubr.f32.mxu0 0.0
  %1978 = vmatmul.mubr.f32.gmra.mrb[0].mxu0 %v1906
  %v1979 = vpop.f32.mrb[0].mxu0
  %v1980 = vadd.f32 0.0, %v1979
  %v1981 = vpop.f32.mrb[0].mxu0
  %1982 = vdwg.mxu0
  %v1983 = vadd.f32 %v1570, %v1975
  %v1984 = vadd.f32 %v1571, %v1980
  %v1985 = vadd.f32 %v135, %v1983
  %v1986 = vadd.f32 %v140, %v1984
  %v1987 = vsel %vm155, %v1985, 0.0
  %1988 = vadd.xlane.f32.xlu0 %v1987
  %v1989 = vpop.xlane.xlu0 %1988
  %v1990 = vsel %vm155, %v1986, 0.0
  %1991 = vadd.xlane.f32.xlu0 %v1990
  %v1992 = vpop.xlane.xlu0 %1991
  %v1993 = vrcp.pop 32.0
  %v1994 = vmul.f32 %v1989, %v1993
  %v1995 = vmul.f32 %v1992, %v1993
  %v1996 = vsub.f32 %v1985, %v1994
  %v1997 = vsub.f32 %v1986, %v1995
  %v1998 = vmul.f32 %v1996, %v1996
  %v1999 = vmul.f32 %v1997, %v1997
  %v2000 = vsel %vm155, %v1998, 0.0
  %2001 = vadd.xlane.f32.xlu0 %v2000
  %v2002 = vpop.xlane.xlu0 %2001
  %v2003 = vsel %vm155, %v1999, 0.0
  %2004 = vadd.xlane.f32.xlu0 %v2003
  %v2005 = vpop.xlane.xlu0 %2004
  %v2006 = vmul.f32 %v2002, %v1993
  %v2007 = vmul.f32 %v2005, %v1993
  %v2008 = vadd.f32 %v2006, 1e-12
  %v2009 = vadd.f32 %v2007, 1e-12
  %v2010 = vrsqrt.pop %v2008
  %v2011 = vrsqrt.pop %v2009
  %v2012 = vmul.f32 %v1996, %v2010
  %v2013 = vmul.f32 %v1997, %v2011
  %v2014 = vlaneseq
  %v2015 = vshrl.u32 %v2014, 7
  %v2016 = vsub.s32 4, %v2015
  %v2017 = vrot.slane %v32, %v2016
  %v2018 = vmul.f32 %v2012, %v2017
  %v2019 = vmul.f32 %v2013, %v2017
  %v2020 = vlaneseq
  %v2021 = vshrl.u32 %v2020, 7
  %v2022 = vsub.s32 5, %v2021
  %v2023 = vrot.slane %v32, %v2022
  %v2024 = vadd.f32 %v2018, %v2023
  %v2025 = vadd.f32 %v2019, %v2023
  %v2026 = vld [vmem:[%s5] sm:$0xff]
  %v2027 = vld [vmem:[%s5 + $0x8] sm:$0xff]
  %v2028 = vld [vmem:[%s5 + $0x10] sm:$0xff]
  %v2029 = vld [vmem:[%s5 + $0x18] sm:$0xff]
  %v2030 = vlaneseq
  %v2031 = vshrl.u32 %v2030, 7
  %v2032 = vsub.s32 6, %v2031
  %v2033 = vrot.slane %v32, %v2032
  %v2035 = vsel %vm155, %v2024, 0
  %v2038 = vsel %vm155, %v2025, 0
  %2040 = vmatprep.subr.mxu0 0.0
  %2041 = vmatpush1.msra.mxu0 %v2026
  %2042 = vmatprep.subr.mxu0 0.0
  %2043 = vmatpush1.msra.mxu0 %v2027
  %2044 = vmatprep.subr.mxu0 0.0
  %2045 = vmatpush1.msra.mxu0 %v2028
  %2046 = vmatprep.subr.mxu0 0.0
  %2047 = vmatpush1.msra.mxu0 %v2029
  %2048 = vmatprep.subr.mxu0 0.0
  %2049 = vmatpush1.msra.mxu0 0.0
  %2050 = vmatprep.subr.mxu0 0.0
  %2051 = vmatpush1.msra.mxu0 0.0
  %2052 = vmatprep.subr.mxu0 0.0
  %2053 = vmatpush1.msra.mxu0 0.0
  %2054 = vmatprep.subr.mxu0 0.0
  %2055 = vmatpush1.msra.mxu0 0.0
  %2056 = vmatprep.subr.mxu0 0.0
  %2057 = vmatpush1.msra.mxu0 0.0
  %2058 = vmatprep.subr.mxu0 0.0
  %2059 = vmatpush1.msra.mxu0 0.0
  %2060 = vmatprep.subr.mxu0 0.0
  %2061 = vmatpush1.msra.mxu0 0.0
  %2062 = vmatprep.subr.mxu0 0.0
  %2063 = vmatpush1.msra.mxu0 0.0
  %2064 = vmatprep.subr.mxu0 0.0
  %2065 = vmatpush1.msra.mxu0 0.0
  %2066 = vmatprep.subr.mxu0 0.0
  %2067 = vmatpush1.msra.mxu0 0.0
  %2068 = vmatprep.subr.mxu0 0.0
  %2069 = vmatpush1.msra.mxu0 0.0
  %2070 = vmatprep.subr.mxu0 0.0
  %2071 = vmatpush1.msra.mxu0 0.0
  %2072 = vmatprep.subr.mxu0 0.0
  %2073 = vmatpush1.msra.mxu0 0.0
  %2074 = vmatprep.subr.mxu0 0.0
  %2075 = vmatpush1.msra.mxu0 0.0
  %2076 = vmatprep.subr.mxu0 0.0
  %2077 = vmatpush1.msra.mxu0 0.0
  %2078 = vmatprep.subr.mxu0 0.0
  %2079 = vmatpush1.msra.mxu0 0.0
  %2080 = vmatprep.subr.mxu0 0.0
  %2081 = vmatpush1.msra.mxu0 0.0
  %2082 = vmatprep.subr.mxu0 0.0
  %2083 = vmatpush1.msra.mxu0 0.0
  %2084 = vmatprep.subr.mxu0 0.0
  %2085 = vmatpush1.msra.mxu0 0.0
  %2086 = vmatprep.subr.mxu0 0.0
  %2087 = vmatpush1.msra.mxu0 0.0
  %2088 = vmatprep.subr.mxu0 0.0
  %2089 = vmatpush1.msra.mxu0 0.0
  %2090 = vmatprep.subr.mxu0 0.0
  %2091 = vmatpush1.msra.mxu0 0.0
  %2092 = vmatprep.subr.mxu0 0.0
  %2093 = vmatpush1.msra.mxu0 0.0
  %2094 = vmatprep.subr.mxu0 0.0
  %2095 = vmatpush1.msra.mxu0 0.0
  %2096 = vmatprep.subr.mxu0 0.0
  %2097 = vmatpush1.msra.mxu0 0.0
  %2098 = vmatprep.subr.mxu0 0.0
  %2099 = vmatpush1.msra.mxu0 0.0
  %2100 = vmatprep.subr.mxu0 0.0
  %2101 = vmatpush1.msra.mxu0 0.0
  %2102 = vmatprep.subr.mxu0 0.0
  %2103 = vmatpush1.msra.mxu0 0.0
  %2104 = vmatprep.mubr.f32.mxu0 0.0
  %2105 = vmatmul.mubr.f32.gmra.mrb[0].mxu0 %v2035
  %v2106 = vpop.f32.mrb[0].mxu0
  %v2107 = vadd.f32 %v2033, %v2106
  %v2108 = vpop.f32.mrb[0].mxu0
  %2109 = vmatprep.mubr.f32.mxu0 0.0
  %2110 = vmatmul.mubr.f32.gmra.mrb[0].mxu0 %v2038
  %v2111 = vpop.f32.mrb[0].mxu0
  %v2112 = vadd.f32 %v2033, %v2111
  %v2113 = vpop.f32.mrb[0].mxu0
  %2114 = vdwg.mxu0
  %v2115 = vmul.f32 %v2107, %v2107
  %v2116 = vmul.f32 %v2112, %v2112
  %v2117 = vmul.f32 %v2107, %v2115
  %v2118 = vmul.f32 %v2112, %v2116
  %v2119 = vmul.f32 %v2117, 0.044715
  %v2120 = vmul.f32 %v2118, 0.044715
  %v2121 = vadd.f32 %v2107, %v2119
  %v2122 = vadd.f32 %v2112, %v2120
  %v2123 = vmul.f32 %v2121, 0.7978846
  %v2124 = vmul.f32 %v2122, 0.7978846
  %v2125 = vtanh.pop %v2123
  %v2126 = vtanh.pop %v2124
  %v2127 = vadd.f32 %v2125, 1.0
  %v2128 = vadd.f32 %v2126, 1.0
  %v2129 = vmul.f32 %v2127, 0.5
  %v2130 = vmul.f32 %v2128, 0.5
  %v2131 = vmul.f32 %v2107, %v2129
  %v2132 = vmul.f32 %v2112, %v2130
  %v2133 = vld [vmem:[%s6] sm:$0xff]
  %v2134 = vld [vmem:[%s6 + $0x8] sm:$0xff]
  %v2135 = vld [vmem:[%s6 + $0x10] sm:$0xff]
  %v2136 = vld [vmem:[%s6 + $0x18] sm:$0xff]
  %v2137 = vld [vmem:[%s6 + $0x20] sm:$0xff]
  %v2138 = vld [vmem:[%s6 + $0x28] sm:$0xff]
  %v2139 = vld [vmem:[%s6 + $0x30] sm:$0xff]
  %v2140 = vld [vmem:[%s6 + $0x38] sm:$0xff]
  %v2141 = vlaneseq
  %v2142 = vshrl.u32 %v2141, 7
  %v2143 = vsub.s32 7, %v2142
  %v2144 = vrot.slane %v32, %v2143
  %vm2145 = vcmask 523264
  %v2147 = vsel %vm2145, %v2131, 0
  %v2150 = vsel %vm2145, %v2132, 0
  %2152 = vmatprep.subr.mxu0 0.0
  %2153 = vmatpush1.msra.mxu0 %v2133
  %2154 = vmatprep.subr.mxu0 0.0
  %2155 = vmatpush1.msra.mxu0 %v2134
  %2156 = vmatprep.subr.mxu0 0.0
  %2157 = vmatpush1.msra.mxu0 %v2135
  %2158 = vmatprep.subr.mxu0 0.0
  %2159 = vmatpush1.msra.mxu0 %v2136
  %2160 = vmatprep.subr.mxu0 0.0
  %2161 = vmatpush1.msra.mxu0 %v2137
  %2162 = vmatprep.subr.mxu0 0.0
  %2163 = vmatpush1.msra.mxu0 %v2138
  %2164 = vmatprep.subr.mxu0 0.0
  %2165 = vmatpush1.msra.mxu0 %v2139
  %2166 = vmatprep.subr.mxu0 0.0
  %2167 = vmatpush1.msra.mxu0 %v2140
  %2168 = vmatprep.subr.mxu0 0.0
  %2169 = vmatpush1.msra.mxu0 0.0
  %2170 = vmatprep.subr.mxu0 0.0
  %2171 = vmatpush1.msra.mxu0 0.0
  %2172 = vmatprep.subr.mxu0 0.0
  %2173 = vmatpush1.msra.mxu0 0.0
  %2174 = vmatprep.subr.mxu0 0.0
  %2175 = vmatpush1.msra.mxu0 0.0
  %2176 = vmatprep.subr.mxu0 0.0
  %2177 = vmatpush1.msra.mxu0 0.0
  %2178 = vmatprep.subr.mxu0 0.0
  %2179 = vmatpush1.msra.mxu0 0.0
  %2180 = vmatprep.subr.mxu0 0.0
  %2181 = vmatpush1.msra.mxu0 0.0
  %2182 = vmatprep.subr.mxu0 0.0
  %2183 = vmatpush1.msra.mxu0 0.0
  %2184 = vmatprep.subr.mxu0 0.0
  %2185 = vmatpush1.msra.mxu0 0.0
  %2186 = vmatprep.subr.mxu0 0.0
  %2187 = vmatpush1.msra.mxu0 0.0
  %2188 = vmatprep.subr.mxu0 0.0
  %2189 = vmatpush1.msra.mxu0 0.0
  %2190 = vmatprep.subr.mxu0 0.0
  %2191 = vmatpush1.msra.mxu0 0.0
  %2192 = vmatprep.subr.mxu0 0.0
  %2193 = vmatpush1.msra.mxu0 0.0
  %2194 = vmatprep.subr.mxu0 0.0
  %2195 = vmatpush1.msra.mxu0 0.0
  %2196 = vmatprep.subr.mxu0 0.0
  %2197 = vmatpush1.msra.mxu0 0.0
  %2198 = vmatprep.subr.mxu0 0.0
  %2199 = vmatpush1.msra.mxu0 0.0
  %2200 = vmatprep.subr.mxu0 0.0
  %2201 = vmatpush1.msra.mxu0 0.0
  %2202 = vmatprep.subr.mxu0 0.0
  %2203 = vmatpush1.msra.mxu0 0.0
  %2204 = vmatprep.subr.mxu0 0.0
  %2205 = vmatpush1.msra.mxu0 0.0
  %2206 = vmatprep.subr.mxu0 0.0
  %2207 = vmatpush1.msra.mxu0 0.0
  %2208 = vmatprep.subr.mxu0 0.0
  %2209 = vmatpush1.msra.mxu0 0.0
  %2210 = vmatprep.subr.mxu0 0.0
  %2211 = vmatpush1.msra.mxu0 0.0
  %2212 = vmatprep.subr.mxu0 0.0
  %2213 = vmatpush1.msra.mxu0 0.0
  %2214 = vmatprep.subr.mxu0 0.0
  %2215 = vmatpush1.msra.mxu0 0.0
  %2216 = vmatprep.mubr.f32.mxu0 0.0
  %2217 = vmatmul.mubr.f32.gmra.mrb[0].mxu0 %v2147
  %v2218 = vpop.f32.mrb[0].mxu0
  %v2219 = vadd.f32 %v2144, %v2218
  %v2220 = vpop.f32.mrb[0].mxu0
  %2221 = vmatprep.mubr.f32.mxu0 0.0
  %2222 = vmatmul.mubr.f32.gmra.mrb[0].mxu0 %v2150
  %v2223 = vpop.f32.mrb[0].mxu0
  %v2224 = vadd.f32 %v2144, %v2223
  %v2225 = vpop.f32.mrb[0].mxu0
  %2226 = vdwg.mxu0
  %v2227 = vadd.f32 %v2024, %v2219
  %v2228 = vadd.f32 %v2025, %v2224
  %v2229 = vsel %vm155, %v2227, 0.0
  %2230 = vadd.xlane.f32.xlu0 %v2229
  %v2231 = vpop.xlane.xlu0 %2230
  %v2232 = vsel %vm155, %v2228, 0.0
  %2233 = vadd.xlane.f32.xlu0 %v2232
  %v2234 = vpop.xlane.xlu0 %2233
  %v2235 = vmul.f32 %v2231, %v1993
  %v2236 = vmul.f32 %v2234, %v1993
  %v2237 = vsub.f32 %v2227, %v2235
  %v2238 = vsub.f32 %v2228, %v2236
  %v2239 = vmul.f32 %v2237, %v2237
  %v2240 = vmul.f32 %v2238, %v2238
  %v2241 = vsel %vm155, %v2239, 0.0
  %2242 = vadd.xlane.f32.xlu0 %v2241
  %v2243 = vpop.xlane.xlu0 %2242
  %v2244 = vsel %vm155, %v2240, 0.0
  %2245 = vadd.xlane.f32.xlu0 %v2244
  %v2246 = vpop.xlane.xlu0 %2245
  %v2247 = vmul.f32 %v2243, %v1993
  %v2248 = vmul.f32 %v2246, %v1993
  %v2249 = vadd.f32 %v2247, 1e-12
  %v2250 = vadd.f32 %v2248, 1e-12
  %v2251 = vrsqrt.pop %v2249
  %v2252 = vrsqrt.pop %v2250
  %v2253 = vmul.f32 %v2237, %v2251
  %v2254 = vmul.f32 %v2238, %v2252
  %v2255 = vlaneseq
  %v2256 = vshrl.u32 %v2255, 7
  %v2257 = vsub.s32 0, %v2256
  %v2258 = vrot.slane %v33, %v2257
  %v2259 = vmul.f32 %v2253, %v2258
  %v2260 = vmul.f32 %v2254, %v2258
  %v2261 = vlaneseq
  %v2262 = vshrl.u32 %v2261, 7
  %v2263 = vsub.s32 1, %v2262
  %v2264 = vrot.slane %v33, %v2263
  %v2265 = vadd.f32 %v2259, %v2264
  %v2266 = vadd.f32 %v2260, %v2264
  %v2267 = vld [vmem:[%s7] sm:$0xff]
  %v2268 = vld [vmem:[%s7 + $0x8] sm:$0xff]
  %v2269 = vld [vmem:[%s7 + $0x10] sm:$0xff]
  %v2270 = vld [vmem:[%s7 + $0x18] sm:$0xff]
  %v2271 = vlaneseq
  %v2272 = vshrl.u32 %v2271, 7
  %v2273 = vsub.s32 2, %v2272
  %v2274 = vrot.slane %v33, %v2273
  %v2276 = vsel %vm155, %v2265, 0
  %v2279 = vsel %vm155, %v2266, 0
  %2281 = vmatprep.subr.mxu0 0.0
  %2282 = vmatpush1.msra.mxu0 %v2267
  %2283 = vmatprep.subr.mxu0 0.0
  %2284 = vmatpush1.msra.mxu0 %v2268
  %2285 = vmatprep.subr.mxu0 0.0
  %2286 = vmatpush1.msra.mxu0 %v2269
  %2287 = vmatprep.subr.mxu0 0.0
  %2288 = vmatpush1.msra.mxu0 %v2270
  %2289 = vmatprep.subr.mxu0 0.0
  %2290 = vmatpush1.msra.mxu0 0.0
  %2291 = vmatprep.subr.mxu0 0.0
  %2292 = vmatpush1.msra.mxu0 0.0
  %2293 = vmatprep.subr.mxu0 0.0
  %2294 = vmatpush1.msra.mxu0 0.0
  %2295 = vmatprep.subr.mxu0 0.0
  %2296 = vmatpush1.msra.mxu0 0.0
  %2297 = vmatprep.subr.mxu0 0.0
  %2298 = vmatpush1.msra.mxu0 0.0
  %2299 = vmatprep.subr.mxu0 0.0
  %2300 = vmatpush1.msra.mxu0 0.0
  %2301 = vmatprep.subr.mxu0 0.0
  %2302 = vmatpush1.msra.mxu0 0.0
  %2303 = vmatprep.subr.mxu0 0.0
  %2304 = vmatpush1.msra.mxu0 0.0
  %2305 = vmatprep.subr.mxu0 0.0
  %2306 = vmatpush1.msra.mxu0 0.0
  %2307 = vmatprep.subr.mxu0 0.0
  %2308 = vmatpush1.msra.mxu0 0.0
  %2309 = vmatprep.subr.mxu0 0.0
  %2310 = vmatpush1.msra.mxu0 0.0
  %2311 = vmatprep.subr.mxu0 0.0
  %2312 = vmatpush1.msra.mxu0 0.0
  %2313 = vmatprep.subr.mxu0 0.0
  %2314 = vmatpush1.msra.mxu0 0.0
  %2315 = vmatprep.subr.mxu0 0.0
  %2316 = vmatpush1.msra.mxu0 0.0
  %2317 = vmatprep.subr.mxu0 0.0
  %2318 = vmatpush1.msra.mxu0 0.0
  %2319 = vmatprep.subr.mxu0 0.0
  %2320 = vmatpush1.msra.mxu0 0.0
  %2321 = vmatprep.subr.mxu0 0.0
  %2322 = vmatpush1.msra.mxu0 0.0
  %2323 = vmatprep.subr.mxu0 0.0
  %2324 = vmatpush1.msra.mxu0 0.0
  %2325 = vmatprep.subr.mxu0 0.0
  %2326 = vmatpush1.msra.mxu0 0.0
  %2327 = vmatprep.subr.mxu0 0.0
  %2328 = vmatpush1.msra.mxu0 0.0
  %2329 = vmatprep.subr.mxu0 0.0
  %2330 = vmatpush1.msra.mxu0 0.0
  %2331 = vmatprep.subr.mxu0 0.0
  %2332 = vmatpush1.msra.mxu0 0.0
  %2333 = vmatprep.subr.mxu0 0.0
  %2334 = vmatpush1.msra.mxu0 0.0
  %2335 = vmatprep.subr.mxu0 0.0
  %2336 = vmatpush1.msra.mxu0 0.0
  %2337 = vmatprep.subr.mxu0 0.0
  %2338 = vmatpush1.msra.mxu0 0.0
  %2339 = vmatprep.subr.mxu0 0.0
  %2340 = vmatpush1.msra.mxu0 0.0
  %2341 = vmatprep.subr.mxu0 0.0
  %2342 = vmatpush1.msra.mxu0 0.0
  %2343 = vmatprep.subr.mxu0 0.0
  %2344 = vmatpush1.msra.mxu0 0.0
  %2345 = vmatprep.mubr.f32.mxu0 0.0
  %2346 = vmatmul.mubr.f32.gmra.mrb[0].mxu0 %v2276
  %v2347 = vpop.f32.mrb[0].mxu0
  %v2348 = vadd.f32 %v2274, %v2347
  %v2349 = vpop.f32.mrb[0].mxu0
  %2350 = vmatprep.mubr.f32.mxu0 0.0
  %2351 = vmatmul.mubr.f32.gmra.mrb[0].mxu0 %v2279
  %v2352 = vpop.f32.mrb[0].mxu0
  %v2353 = vadd.f32 %v2274, %v2352
  %v2354 = vpop.f32.mrb[0].mxu0
  %2355 = vdwg.mxu0
  %2356 = vst [vmem:[%s9] sm:$0xff] %v2348
  %2357 = vst [vmem:[%s9 + $0x8] sm:$0xff] %v2353
  // Predicated region
  $region38: #{transformer_model_forward.1} parent=0 // pred_check
    _
  $region39: #{transformer_model_forward.1} parent=0 // pred_check_branch
    %2359 = sbr.rel (0) target = $region41
  $region40: #{transformer_model_forward.1} parent=0 // pred_region
    _
  $region41: #{transformer_model_forward.1} parent=0 // pred_fallthru
    _
  // Predicated region
  $region42: #{transformer_model_forward.1} parent=0 // pred_check
    _
  $region43: #{transformer_model_forward.1} parent=0 // pred_check_branch
    %2361 = sbr.rel (0) target = $region45
  $region44: #{transformer_model_forward.1} parent=0 // pred_region
    _
  $region45: #{transformer_model_forward.1} parent=0 // pred_fallthru
    _

</llo_original>
